<compile_context>
chip_gen: v6e
topology: v6e:2x2x1
jax: 0.10.0
libtpu: 0.0.40
codegen_flags: <defaults>
</compile_context>

<pallas_src>
import jax
import jax.numpy as jnp
from jax import lax
from jax.experimental import pallas as pl
from jax.experimental.pallas import tpu as pltpu

LN_EPS = 1e-5                    # PyTorch nn.LayerNorm default
_INV_SQRT2 = 0.7071067811865476  # 1/sqrt(2) for exact-erf GELU


def _round_up(a, b):
    return ((a + b - 1) // b) * b


def _eq3_kernel(x_ref, g_ref, b_ref, w1_ref, b1_ref, w2_ref, b2_ref, o_ref):
    # --- LayerNorm over the feature (last) dimension, stats in f32 ---
    x = x_ref[...].astype(jnp.float32)
    mean = jnp.mean(x, axis=-1, keepdims=True)
    xc = x - mean                                    # reused for var and norm
    var = jnp.mean(xc * xc, axis=-1, keepdims=True)  # biased variance
    xn = xc * lax.rsqrt(var + LN_EPS)
    xn = xn * g_ref[...].astype(jnp.float32) + b_ref[...].astype(jnp.float32)

    # --- Linear1: (tm, E) @ (E, M) + b1 ---
    # Feed the MXU in the weight dtype (bf16 when weights are bf16), accumulate f32.
    h = jnp.dot(xn.astype(w1_ref.dtype), w1_ref[...],
                preferred_element_type=jnp.float32)
    h = h + b1_ref[...].astype(jnp.float32)

    # --- Dropout (p=0.1) is identity in eval mode ---
    # TODO(synk): training-mode dropout (stateful PRNG mask) not implemented.

    # --- GELU (exact / erf form, PyTorch nn.GELU default) ---
    h = 0.5 * h * (1.0 + lax.erf(h * jnp.float32(_INV_SQRT2)))

    # --- Linear2: (tm, M) @ (M, E) + b2 ---
    y = jnp.dot(h.astype(w2_ref.dtype), w2_ref[...],
                preferred_element_type=jnp.float32)
    y = y + b2_ref[...].astype(jnp.float32)

    o_ref[...] = y.astype(o_ref.dtype)


def equation3_layer(x, gamma, beta, w1, b1, w2, b2, *, tm=None):
    """x: (B, S, E) -> (B, S, E)."""
    B, S, E = x.shape
    M = w1.shape[1]
    T = B * S

    # Token-tile rows: a sizable multiple of the MXU row dim so the grid has
    # many steps (pipelining + both TCs on v7x). Must be a multiple of the
    # sublane packing (8 for f32, 16 for bf16).
    row_align = 16 if x.dtype == jnp.bfloat16 else 8
    if tm is None:
        tm = 256  # good default for v6e/v7x; also fine on v5e at these shapes
    tm = _round_up(max(row_align, min(tm, _round_up(T, row_align))), row_align)
    Tpad = _round_up(T, tm)
    grid = Tpad // tm

    x2 = x.reshape(T, E)
    if Tpad != T:
        x2 = jnp.pad(x2, ((0, Tpad - T), (0, 0)))  # padded rows discarded below

    g2 = gamma.reshape(1, E)
    be2 = beta.reshape(1, E)
    b1_2 = b1.reshape(1, M)
    b2_2 = b2.reshape(1, E)

    # VMEM budget: 2x x-tile + 2x out-tile (double-buffered) + 1x each param
    # (single-buffered) + f32 intermediates. Cap below v7x's 64 MiB physical.
    x_bytes = jnp.dtype(x.dtype).itemsize
    w_bytes = jnp.dtype(w1.dtype).itemsize
    param_bytes = ((w1.size + b1.size + w2.size + b2.size) * w_bytes
                   + (gamma.size + beta.size) * jnp.dtype(gamma.dtype).itemsize)
    tile_bytes = tm * E * x_bytes
    inter_bytes = tm * M * 4 + 3 * tm * E * 4
    vmem_need = 4 * tile_bytes + param_bytes + inter_bytes
    vmem_limit = int(min(max(32 << 20, 2 * vmem_need), 60 << 20))
    # TODO(synk): for very large E/M (e.g. M=4096 f32) add an N-tiling grid axis
    # over the weight dimension instead of shrinking tm.

    cost = pl.CostEstimate(
        flops=int(4 * T * E * M),                       # two (T,E)x(E,M)-class matmuls
        transcendentals=int(T * M),                     # erf on the (T, M) intermediate
        bytes_accessed=int(2 * T * E * x_bytes + param_bytes),
    )

    invariant = pl.Buffered(1)  # grid-invariant blocks: no double-buffering

    out = pl.pallas_call(
        _eq3_kernel,
        out_shape=jax.ShapeDtypeStruct((Tpad, E), x.dtype),
        grid_spec=pltpu.PrefetchScalarGridSpec(
            num_scalar_prefetch=0,
            grid=(grid,),
            in_specs=[
                pl.BlockSpec((tm, E), lambda i: (i, 0)),                            # x tile
                pl.BlockSpec((1, E), lambda i: (0, 0), pipeline_mode=invariant),    # gamma
                pl.BlockSpec((1, E), lambda i: (0, 0), pipeline_mode=invariant),    # beta
                pl.BlockSpec((E, M), lambda i: (0, 0), pipeline_mode=invariant),    # W1
                pl.BlockSpec((1, M), lambda i: (0, 0), pipeline_mode=invariant),    # b1
                pl.BlockSpec((M, E), lambda i: (0, 0), pipeline_mode=invariant),    # W2
                pl.BlockSpec((1, E), lambda i: (0, 0), pipeline_mode=invariant),    # b2
            ],
            out_specs=pl.BlockSpec((tm, E), lambda i: (i, 0)),
        ),
        compiler_params=pltpu.CompilerParams(
            dimension_semantics=("parallel",),
            vmem_limit_bytes=vmem_limit,
        ),
        cost_estimate=cost,
    )(x2, g2, be2, w1, b1_2, w2, b2_2)

    if Tpad != T:
        out = out[:T]
    return out.reshape(B, S, E)


def _reference(x, gamma, beta, w1, b1, w2, b2):
    xf = x.astype(jnp.float32)
    mean = jnp.mean(xf, axis=-1, keepdims=True)
    var = jnp.mean((xf - mean) ** 2, axis=-1, keepdims=True)
    xn = (xf - mean) / jnp.sqrt(var + LN_EPS) * gamma + beta
    h = xn @ w1 + b1
    h = 0.5 * h * (1.0 + lax.erf(h / jnp.sqrt(2.0)))
    y = h @ w2 + b2
    return y.astype(x.dtype)


if __name__ == "__main__":
    # Small shapes consistent with the module: (batch, seq, embedding_dim) and mlp_size.
    # T = B*S = 512 -> a 2-step token grid with the default tm=256.
    B, S, E, M = 4, 128, 128, 256

    key = jax.random.PRNGKey(0)
    kx, kg, kb, kw1, kb1, kw2, kb2 = jax.random.split(key, 7)

    x = jax.random.normal(kx, (B, S, E), dtype=jnp.float32)

    # Deterministic parameter init (LayerNorm affine + two Linear layers).
    gamma = jnp.ones((E,), jnp.float32) + 0.01 * jax.random.normal(kg, (E,), jnp.float32)
    beta = 0.01 * jax.random.normal(kb, (E,), jnp.float32)
    w1 = jax.random.normal(kw1, (E, M), jnp.float32) * (1.0 / jnp.sqrt(E))
    b1 = 0.01 * jax.random.normal(kb1, (M,), jnp.float32)
    w2 = jax.random.normal(kw2, (M, E), jnp.float32) * (1.0 / jnp.sqrt(M))
    b2 = 0.01 * jax.random.normal(kb2, (E,), jnp.float32)

    y = equation3_layer(x, gamma, beta, w1, b1, w2, b2)
    y = jax.block_until_ready(y)

    y_ref = _reference(x, gamma, beta, w1, b1, w2, b2)
    assert y.shape == (B, S, E)
    max_err = float(jnp.max(jnp.abs(y - y_ref)))
    assert jnp.allclose(y, y_ref, atol=1e-3, rtol=1e-3), f"mismatch vs reference (max err {max_err})"

    print("KERNEL_OK")
</pallas_src>

<mosaic_0001>
module attributes {stable_mosaic.version = 11 : i64} {
  func.func @_eq3_kernel(%arg0: i32, %arg1: memref<256x128xf32, #tpu.memory_space<vmem>>, %arg2: memref<1x128xf32, #tpu.memory_space<vmem>>, %arg3: memref<1x128xf32, #tpu.memory_space<vmem>>, %arg4: memref<128x256xf32, #tpu.memory_space<vmem>>, %arg5: memref<1x256xf32, #tpu.memory_space<vmem>>, %arg6: memref<256x128xf32, #tpu.memory_space<vmem>>, %arg7: memref<1x128xf32, #tpu.memory_space<vmem>>, %arg8: memref<256x128xf32, #tpu.memory_space<vmem>>) attributes {dimension_semantics = [#tpu.dimension_semantics<parallel>], iteration_bounds = array<i64: 2>, scalar_prefetch = 0 : i64, scratch_operands = 0 : i64, tpu.core_type = #tpu.core_type<tc>, window_params = [{transform_indices = @transform_0, window_bounds = array<i64: 256, 128>}, {pipeline_mode = #tpu.pipeline_mode<synchronous>, transform_indices = @transform_1, window_bounds = array<i64: 1, 128>}, {pipeline_mode = #tpu.pipeline_mode<synchronous>, transform_indices = @transform_2, window_bounds = array<i64: 1, 128>}, {pipeline_mode = #tpu.pipeline_mode<synchronous>, transform_indices = @transform_3, window_bounds = array<i64: 128, 256>}, {pipeline_mode = #tpu.pipeline_mode<synchronous>, transform_indices = @transform_4, window_bounds = array<i64: 1, 256>}, {pipeline_mode = #tpu.pipeline_mode<synchronous>, transform_indices = @transform_5, window_bounds = array<i64: 256, 128>}, {pipeline_mode = #tpu.pipeline_mode<synchronous>, transform_indices = @transform_6, window_bounds = array<i64: 1, 128>}, {transform_indices = @transform_7, window_bounds = array<i64: 256, 128>}]} {
    %c0 = arith.constant 0 : index
    %c0_0 = arith.constant 0 : index
    %0 = vector.load %arg1[%c0, %c0_0] : memref<256x128xf32, #tpu.memory_space<vmem>>, vector<256x128xf32>
    %cst = arith.constant dense<0.000000e+00> : vector<256xf32>
    %1 = vector.multi_reduction <add>, %0, %cst [1] : vector<256x128xf32> to vector<256xf32>
    %2 = vector.shape_cast %1 : vector<256xf32> to vector<256x1xf32>
    %cst_1 = arith.constant 1.280000e+02 : f32
    %3 = vector.broadcast %cst_1 : f32 to vector<256x1xf32>
    %4 = arith.divf %2, %3 : vector<256x1xf32>
    %5 = vector.broadcast %4 : vector<256x1xf32> to vector<256x128xf32>
    %6 = arith.subf %0, %5 : vector<256x128xf32>
    %7 = arith.mulf %6, %6 : vector<256x128xf32>
    %cst_2 = arith.constant dense<0.000000e+00> : vector<256xf32>
    %8 = vector.multi_reduction <add>, %7, %cst_2 [1] : vector<256x128xf32> to vector<256xf32>
    %9 = vector.shape_cast %8 : vector<256xf32> to vector<256x1xf32>
    %cst_3 = arith.constant 1.280000e+02 : f32
    %10 = vector.broadcast %cst_3 : f32 to vector<256x1xf32>
    %11 = arith.divf %9, %10 : vector<256x1xf32>
    %cst_4 = arith.constant 9.99999974E-6 : f32
    %12 = vector.broadcast %cst_4 : f32 to vector<256x1xf32>
    %13 = arith.addf %11, %12 : vector<256x1xf32>
    %14 = math.rsqrt %13 : vector<256x1xf32>
    %15 = vector.broadcast %14 : vector<256x1xf32> to vector<256x128xf32>
    %16 = arith.mulf %6, %15 : vector<256x128xf32>
    %c0_5 = arith.constant 0 : index
    %c0_6 = arith.constant 0 : index
    %17 = vector.load %arg2[%c0_5, %c0_6] : memref<1x128xf32, #tpu.memory_space<vmem>>, vector<1x128xf32>
    %18 = vector.broadcast %17 : vector<1x128xf32> to vector<256x128xf32>
    %19 = arith.mulf %16, %18 : vector<256x128xf32>
    %c0_7 = arith.constant 0 : index
    %c0_8 = arith.constant 0 : index
    %20 = vector.load %arg3[%c0_7, %c0_8] : memref<1x128xf32, #tpu.memory_space<vmem>>, vector<1x128xf32>
    %21 = vector.broadcast %20 : vector<1x128xf32> to vector<256x128xf32>
    %22 = arith.addf %19, %21 : vector<256x128xf32>
    %c0_9 = arith.constant 0 : index
    %c0_10 = arith.constant 0 : index
    %23 = vector.load %arg4[%c0_9, %c0_10] : memref<128x256xf32, #tpu.memory_space<vmem>>, vector<128x256xf32>
    %cst_11 = arith.constant dense<0.000000e+00> : vector<256x256xf32>
    %24 = tpu.matmul %22, %23, %cst_11 {dimension_numbers = #tpu.dot_dimension_numbers<[1], [0], [0], [1], [0, 0, 1, 1], [], []>} : vector<256x128xf32>, vector<128x256xf32>, vector<256x256xf32> -> vector<256x256xf32>
    %c0_12 = arith.constant 0 : index
    %c0_13 = arith.constant 0 : index
    %25 = vector.load %arg5[%c0_12, %c0_13] : memref<1x256xf32, #tpu.memory_space<vmem>>, vector<1x256xf32>
    %26 = vector.broadcast %25 : vector<1x256xf32> to vector<256x256xf32>
    %27 = arith.addf %24, %26 : vector<256x256xf32>
    %cst_14 = arith.constant 5.000000e-01 : f32
    %28 = vector.broadcast %cst_14 : f32 to vector<256x256xf32>
    %29 = arith.mulf %28, %27 : vector<256x256xf32>
    %cst_15 = arith.constant 0.707106769 : f32
    %30 = vector.broadcast %cst_15 : f32 to vector<256x256xf32>
    %31 = arith.mulf %27, %30 : vector<256x256xf32>
    %32 = math.erf %31 : vector<256x256xf32>
    %cst_16 = arith.constant 1.000000e+00 : f32
    %33 = vector.broadcast %cst_16 : f32 to vector<256x256xf32>
    %34 = arith.addf %33, %32 : vector<256x256xf32>
    %35 = arith.mulf %29, %34 : vector<256x256xf32>
    %c0_17 = arith.constant 0 : index
    %c0_18 = arith.constant 0 : index
    %36 = vector.load %arg6[%c0_17, %c0_18] : memref<256x128xf32, #tpu.memory_space<vmem>>, vector<256x128xf32>
    %cst_19 = arith.constant dense<0.000000e+00> : vector<256x128xf32>
    %37 = tpu.matmul %35, %36, %cst_19 {dimension_numbers = #tpu.dot_dimension_numbers<[1], [0], [0], [1], [0, 0, 1, 1], [], []>} : vector<256x256xf32>, vector<256x128xf32>, vector<256x128xf32> -> vector<256x128xf32>
    %c0_20 = arith.constant 0 : index
    %c0_21 = arith.constant 0 : index
    %38 = vector.load %arg7[%c0_20, %c0_21] : memref<1x128xf32, #tpu.memory_space<vmem>>, vector<1x128xf32>
    %39 = vector.broadcast %38 : vector<1x128xf32> to vector<256x128xf32>
    %40 = arith.addf %37, %39 : vector<256x128xf32>
    %c0_22 = arith.constant 0 : index
    %c0_23 = arith.constant 0 : index
    %41 = vector.load %arg8[%c0_22, %c0_23] : memref<256x128xf32, #tpu.memory_space<vmem>>, vector<256x128xf32>
    tpu.vector_store %arg8[%c0_22, %c0_23], %40 {strides = array<i32>} : memref<256x128xf32, #tpu.memory_space<vmem>>, vector<256x128xf32>,
    return
  }
  func.func @transform_0(%arg0: i32) -> (i32, i32) {
    %c0_i32 = arith.constant 0 : i32
    %c0_i32_0 = arith.constant 0 : i32
    return %arg0, %c0_i32 : i32, i32
  }
  func.func @transform_1(%arg0: i32) -> (i32, i32) {
    %c0_i32 = arith.constant 0 : i32
    %c0_i32_0 = arith.constant 0 : i32
    %c0_i32_1 = arith.constant 0 : i32
    return %c0_i32, %c0_i32_0 : i32, i32
  }
  func.func @transform_2(%arg0: i32) -> (i32, i32) {
    %c0_i32 = arith.constant 0 : i32
    %c0_i32_0 = arith.constant 0 : i32
    %c0_i32_1 = arith.constant 0 : i32
    return %c0_i32, %c0_i32_0 : i32, i32
  }
  func.func @transform_3(%arg0: i32) -> (i32, i32) {
    %c0_i32 = arith.constant 0 : i32
    %c0_i32_0 = arith.constant 0 : i32
    %c0_i32_1 = arith.constant 0 : i32
    return %c0_i32, %c0_i32_0 : i32, i32
  }
  func.func @transform_4(%arg0: i32) -> (i32, i32) {
    %c0_i32 = arith.constant 0 : i32
    %c0_i32_0 = arith.constant 0 : i32
    %c0_i32_1 = arith.constant 0 : i32
    return %c0_i32, %c0_i32_0 : i32, i32
  }
  func.func @transform_5(%arg0: i32) -> (i32, i32) {
    %c0_i32 = arith.constant 0 : i32
    %c0_i32_0 = arith.constant 0 : i32
    %c0_i32_1 = arith.constant 0 : i32
    return %c0_i32, %c0_i32_0 : i32, i32
  }
  func.func @transform_6(%arg0: i32) -> (i32, i32) {
    %c0_i32 = arith.constant 0 : i32
    %c0_i32_0 = arith.constant 0 : i32
    %c0_i32_1 = arith.constant 0 : i32
    return %c0_i32, %c0_i32_0 : i32, i32
  }
  func.func @transform_7(%arg0: i32) -> (i32, i32) {
    %c0_i32 = arith.constant 0 : i32
    %c0_i32_0 = arith.constant 0 : i32
    return %arg0, %c0_i32 : i32, i32
  }
}

</mosaic_0001>

<llo_original>
// kernel: tpu_custom_call.1
$region0: #{tpu_custom_call.1}
  #allocation0 [shape = 'u32[]', space=smem, size = 0x4, offset = 0x4, fixed_abs, tag = 'smem constant byte address 0x4 - core index']
  #allocation1 [shape = 'u32[144,128]{1,0:T(1,128)}', space=vmem, size = 0x12000, scoped, tag = 'internal scratch']
  %s0 = inlined_call_operand.hbm [shape: f32[512,128], index: 0, kind: input, shape index: {}]
  %s1 = inlined_call_operand.vmem [shape: f32[1,128], index: 1, kind: input, shape index: {}]
  %s2 = inlined_call_operand.hbm [shape: f32[1,128], index: 2, kind: input, shape index: {}]
  %s3 = inlined_call_operand.hbm [shape: f32[128,256], index: 3, kind: input, shape index: {}]
  %s4 = inlined_call_operand.vmem [shape: f32[1,256], index: 4, kind: input, shape index: {}]
  %s5 = inlined_call_operand.hbm [shape: f32[256,128], index: 5, kind: input, shape index: {}]
  %s6 = inlined_call_operand.vmem [shape: f32[1,128], index: 6, kind: input, shape index: {}]
  %s7 = inlined_call_operand.hbm [shape: f32[512,128], index: 7, kind: output, shape index: {}]
  %s8 = sld [smem:[#allocation0]]
  $region77: #{tpu_custom_call.1} parent=0
    _
  %s10 = ssub.s32 1, %s8
  %s11 = scalar_select 0, %s10, %s8
  $region1: #{tpu_custom_call.1} parent=0
    #allocation2 [shape = 'u8[262144]{0}', space=vmem, size = 0x40000, scoped, tag = 'input window, operand 0']
    #allocation3 [shape = 's32[2]{0}', space=sflag, size = 0x8, scoped, tag = 'scoped memory for tpu_custom_call.1']
    #allocation4 [shape = 's32[2]{0}', space=sflag, size = 0x8, scoped, tag = 'scoped memory for tpu_custom_call.1']
    #allocation5 [shape = 'u8[512]{0}', space=vmem, size = 0x400, scoped, tag = 'input window, operand 2, single buffered']
    #allocation6 [shape = 's32[1]{0}', space=sflag, size = 0x4, scoped, tag = 'scoped memory for tpu_custom_call.1']
    #allocation7 [shape = 'u8[131072]{0}', space=vmem, size = 0x20000, scoped, tag = 'input window, operand 3, single buffered']
    #allocation8 [shape = 'u8[131072]{0}', space=vmem, size = 0x20000, scoped, tag = 'input window, operand 5, single buffered']
    #allocation9 [shape = 's32[1]{0}', space=sflag, size = 0x4, scoped, tag = 'scoped memory for tpu_custom_call.1']
    #allocation10 [shape = 'u8[262144]{0}', space=vmem, size = 0x40000, scoped, tag = 'output window, operand 0']
    %12 = vsyncpa [#allocation3], 0
    %s13 = scalar_lea.sflag [#allocation3], 1
    %14 = vsyncpa %s13, 0
    %15 = vsyncpa [#allocation6], 0
    %16 = vsyncpa [#allocation9], 0
    %17 = vsyncpa [#allocation4], 0
    %s18 = scalar_lea.sflag [#allocation4], 1
    %19 = vsyncpa %s18, 0
    loop: start=0, step=1, limit=4
    $region2: #{tpu_custom_call.1} parent=1 // loop_pre_header
      _
    $region3: #{tpu_custom_call.1} parent=1 // loop_header
      %s21 = sphi 0, %s25
      %p22 = scmp.ge.s32.totalorder %s21, 4
      %s31 = sphi 0, %s33
      %s34 = sphi 0, %s31
      %s35 = sphi 0, %s34
      %s51 = sphi 0, %s35
      %s55 = sphi 0, %s55
      %s57 = sphi 0, %s55
      %s58 = sphi 0, %s57
      %s72 = sphi 0, %s58
      %s76 = sphi 0, %s76
      %s78 = sphi 0, %s76
      %s79 = sphi 0, %s78
      %s93 = sphi 0, %s79
      %s97 = sphi 0, %s97
      %s99 = sphi 0, %s97
      %s100 = sphi 0, %s99
      %s114 = sphi 0, %s100
      %s118 = sphi 0, %s118
      %s120 = sphi 0, %s118
      %s121 = sphi 0, %s120
      %s135 = sphi 0, %s121
      %s139 = sphi 0, %s139
      %s141 = sphi 0, %s139
      %s142 = sphi 0, %s141
      %s156 = sphi 0, %s142
      %s160 = sphi 0, %s160
      %s162 = sphi 0, %s160
      %s163 = sphi 0, %s162
      %s177 = sphi 0, %s163
      %s183 = sphi 0, %s185
      %s186 = sphi 0, %s183
      %s187 = sphi 0, %s186
      %s203 = sphi 0, %s187
    $region4: #{tpu_custom_call.1} parent=1 // loop_header_branch
      %24 = sbr.rel (%p22) target = $region8
    $region5: #{tpu_custom_call.1} parent=1 // loop_body
      %s26 = ssub.s32 %s21, 1
      %s27 = ssub.s32 %s21, 2
      %s28 = sadd.s32 %s21, 1
      %s29 = ssub.s32 %s21, %s28
      %p30 = scmp.eq.s32.totalorder %s29, 0
      %s32 = sadd.s32 %s31, 1
      %s33 = scalar_select %p30, %s31, %s32
      %p36 = pneg %p30
      %p37 = scmp.eq.s32.totalorder %s21, 1
      %p38 = por %p36, %p37
      %p39 = scmp.ne.s32.totalorder %s31, %s34
      %p40 = scmp.eq.s32.totalorder %s21, 0
      %p41 = por %p39, %p40
      %p42 = scmp.ne.s32.totalorder %s31, %s34
      %p43 = scmp.eq.s32.totalorder %s26, 1
      %p44 = por %p42, %p43
      %p45 = scmp.ne.s32.totalorder %s34, %s35
      %p46 = scmp.eq.s32.totalorder %s26, 0
      %p47 = por %p45, %p46
      %p48 = scmp.ne.s32.totalorder %s34, %s35
      %p49 = scmp.eq.s32.totalorder %s27, 1
      %p50 = por %p48, %p49
      %p52 = scmp.ne.s32.totalorder %s35, %s51
      %p53 = scmp.eq.s32.totalorder %s27, 0
      %p54 = por %p52, %p53
      %s56 = sadd.s32 %s55, 1
      %p59 = scmp.eq.s32.totalorder %s21, 1
      %p60 = scmp.ne.s32.totalorder %s55, %s57
      %p61 = scmp.eq.s32.totalorder %s21, 0
      %p62 = por %p60, %p61
      %p63 = scmp.ne.s32.totalorder %s55, %s57
      %p64 = scmp.eq.s32.totalorder %s26, 1
      %p65 = por %p63, %p64
      %p66 = scmp.ne.s32.totalorder %s57, %s58
      %p67 = scmp.eq.s32.totalorder %s26, 0
      %p68 = por %p66, %p67
      %p69 = scmp.ne.s32.totalorder %s57, %s58
      %p70 = scmp.eq.s32.totalorder %s27, 1
      %p71 = por %p69, %p70
      %p73 = scmp.ne.s32.totalorder %s58, %s72
      %p74 = scmp.eq.s32.totalorder %s27, 0
      %p75 = por %p73, %p74
      %s77 = sadd.s32 %s76, 1
      %p80 = scmp.eq.s32.totalorder %s21, 1
      %p81 = scmp.ne.s32.totalorder %s76, %s78
      %p82 = scmp.eq.s32.totalorder %s21, 0
      %p83 = por %p81, %p82
      %p84 = scmp.ne.s32.totalorder %s76, %s78
      %p85 = scmp.eq.s32.totalorder %s26, 1
      %p86 = por %p84, %p85
      %p87 = scmp.ne.s32.totalorder %s78, %s79
      %p88 = scmp.eq.s32.totalorder %s26, 0
      %p89 = por %p87, %p88
      %p90 = scmp.ne.s32.totalorder %s78, %s79
      %p91 = scmp.eq.s32.totalorder %s27, 1
      %p92 = por %p90, %p91
      %p94 = scmp.ne.s32.totalorder %s79, %s93
      %p95 = scmp.eq.s32.totalorder %s27, 0
      %p96 = por %p94, %p95
      %s98 = sadd.s32 %s97, 1
      %p101 = scmp.eq.s32.totalorder %s21, 1
      %p102 = scmp.ne.s32.totalorder %s97, %s99
      %p103 = scmp.eq.s32.totalorder %s21, 0
      %p104 = por %p102, %p103
      %p105 = scmp.ne.s32.totalorder %s97, %s99
      %p106 = scmp.eq.s32.totalorder %s26, 1
      %p107 = por %p105, %p106
      %p108 = scmp.ne.s32.totalorder %s99, %s100
      %p109 = scmp.eq.s32.totalorder %s26, 0
      %p110 = por %p108, %p109
      %p111 = scmp.ne.s32.totalorder %s99, %s100
      %p112 = scmp.eq.s32.totalorder %s27, 1
      %p113 = por %p111, %p112
      %p115 = scmp.ne.s32.totalorder %s100, %s114
      %p116 = scmp.eq.s32.totalorder %s27, 0
      %p117 = por %p115, %p116
      %s119 = sadd.s32 %s118, 1
      %p122 = scmp.eq.s32.totalorder %s21, 1
      %p123 = scmp.ne.s32.totalorder %s118, %s120
      %p124 = scmp.eq.s32.totalorder %s21, 0
      %p125 = por %p123, %p124
      %p126 = scmp.ne.s32.totalorder %s118, %s120
      %p127 = scmp.eq.s32.totalorder %s26, 1
      %p128 = por %p126, %p127
      %p129 = scmp.ne.s32.totalorder %s120, %s121
      %p130 = scmp.eq.s32.totalorder %s26, 0
      %p131 = por %p129, %p130
      %p132 = scmp.ne.s32.totalorder %s120, %s121
      %p133 = scmp.eq.s32.totalorder %s27, 1
      %p134 = por %p132, %p133
      %p136 = scmp.ne.s32.totalorder %s121, %s135
      %p137 = scmp.eq.s32.totalorder %s27, 0
      %p138 = por %p136, %p137
      %s140 = sadd.s32 %s139, 1
      %p143 = scmp.eq.s32.totalorder %s21, 1
      %p144 = scmp.ne.s32.totalorder %s139, %s141
      %p145 = scmp.eq.s32.totalorder %s21, 0
      %p146 = por %p144, %p145
      %p147 = scmp.ne.s32.totalorder %s139, %s141
      %p148 = scmp.eq.s32.totalorder %s26, 1
      %p149 = por %p147, %p148
      %p150 = scmp.ne.s32.totalorder %s141, %s142
      %p151 = scmp.eq.s32.totalorder %s26, 0
      %p152 = por %p150, %p151
      %p153 = scmp.ne.s32.totalorder %s141, %s142
      %p154 = scmp.eq.s32.totalorder %s27, 1
      %p155 = por %p153, %p154
      %p157 = scmp.ne.s32.totalorder %s142, %s156
      %p158 = scmp.eq.s32.totalorder %s27, 0
      %p159 = por %p157, %p158
      %s161 = sadd.s32 %s160, 1
      %p164 = scmp.eq.s32.totalorder %s21, 1
      %p165 = scmp.ne.s32.totalorder %s160, %s162
      %p166 = scmp.eq.s32.totalorder %s21, 0
      %p167 = por %p165, %p166
      %p168 = scmp.ne.s32.totalorder %s160, %s162
      %p169 = scmp.eq.s32.totalorder %s26, 1
      %p170 = por %p168, %p169
      %p171 = scmp.ne.s32.totalorder %s162, %s163
      %p172 = scmp.eq.s32.totalorder %s26, 0
      %p173 = por %p171, %p172
      %p174 = scmp.ne.s32.totalorder %s162, %s163
      %p175 = scmp.eq.s32.totalorder %s27, 1
      %p176 = por %p174, %p175
      %p178 = scmp.ne.s32.totalorder %s163, %s177
      %p179 = scmp.eq.s32.totalorder %s27, 0
      %p180 = por %p178, %p179
      %s181 = ssub.s32 %s21, %s28
      %p182 = scmp.eq.s32.totalorder %s181, 0
      %s184 = sadd.s32 %s183, 1
      %s185 = scalar_select %p182, %s183, %s184
      %p188 = pneg %p182
      %p189 = scmp.eq.s32.totalorder %s21, 1
      %p190 = por %p188, %p189
      %p191 = scmp.ne.s32.totalorder %s183, %s186
      %p192 = scmp.eq.s32.totalorder %s21, 0
      %p193 = por %p191, %p192
      %p194 = scmp.ne.s32.totalorder %s183, %s186
      %p195 = scmp.eq.s32.totalorder %s26, 1
      %p196 = por %p194, %p195
      %p197 = scmp.ne.s32.totalorder %s186, %s187
      %p198 = scmp.eq.s32.totalorder %s26, 0
      %p199 = por %p197, %p198
      %p200 = scmp.ne.s32.totalorder %s186, %s187
      %p201 = scmp.eq.s32.totalorder %s27, 1
      %p202 = por %p200, %p201
      %p204 = scmp.ne.s32.totalorder %s187, %s203
      %p205 = scmp.eq.s32.totalorder %s27, 0
      %p206 = por %p204, %p205
      %p207 = scmp.le.s32.totalorder 1, %s21
      %p208 = scmp.lt.s32.totalorder %s21, 3
      %p209 = pnand %p207, %p208
      %p210 = pneg %p209
      // Predicated region
      $region9: #{tpu_custom_call.1} parent=5 // pred_check
        _
      $region10: #{tpu_custom_call.1} parent=5 // pred_check_branch
        %212 = sbr.rel (%p209) target = $region12
      $region11: #{tpu_custom_call.1} parent=5 // pred_region
        %s213 = ssub.s32 %s21, 1
        // Predicated region
        $region13: #{tpu_custom_call.1} parent=11 // pred_check
          %p214 = pneg %p68
        $region14: #{tpu_custom_call.1} parent=11 // pred_check_branch
          %216 = sbr.rel (%p214) target = $region16
        $region15: #{tpu_custom_call.1} parent=11 // pred_region
          _
        $region16: #{tpu_custom_call.1} parent=11 // pred_fallthru
          _
        // Predicated region
        $region17: #{tpu_custom_call.1} parent=11 // pred_check
          %p217 = pneg %p89
        $region18: #{tpu_custom_call.1} parent=11 // pred_check_branch
          %219 = sbr.rel (%p217) target = $region20
        $region19: #{tpu_custom_call.1} parent=11 // pred_region
          %s221 = ssub.s32 16, 16
          %222 = vsyncadd [#allocation6], %s221
          %s224 = sshll.u32 [#allocation5], 4
          %s225 = int_to_ptr.vmem [resolvable:$true] %s224
          %227 = dma.hbm_to_vmem [thread:$0]  %s2, 16, %s225, [#allocation6]
        $region20: #{tpu_custom_call.1} parent=11 // pred_fallthru
          _
        // Predicated region
        $region21: #{tpu_custom_call.1} parent=11 // pred_check
          %p228 = pneg %p110
        $region22: #{tpu_custom_call.1} parent=11 // pred_check_branch
          %230 = sbr.rel (%p228) target = $region24
        $region23: #{tpu_custom_call.1} parent=11 // pred_region
          %s232 = ssub.s32 4096, 4096
          %233 = vsyncadd [#allocation6], %s232
          %s234 = sshll.u32 [#allocation7], 4
          %s235 = int_to_ptr.vmem [resolvable:$true] %s234
          %240 = dma.hbm_to_vmem [thread:$0]  %s3, 4096, %s235, [#allocation6], 256, 256, 16
        $region24: #{tpu_custom_call.1} parent=11 // pred_fallthru
          _
        // Predicated region
        $region25: #{tpu_custom_call.1} parent=11 // pred_check
          %p241 = pneg %p131
        $region26: #{tpu_custom_call.1} parent=11 // pred_check_branch
          %243 = sbr.rel (%p241) target = $region28
        $region27: #{tpu_custom_call.1} parent=11 // pred_region
          _
        $region28: #{tpu_custom_call.1} parent=11 // pred_fallthru
          _
        // Predicated region
        $region29: #{tpu_custom_call.1} parent=11 // pred_check
          %p244 = pneg %p152
        $region30: #{tpu_custom_call.1} parent=11 // pred_check_branch
          %246 = sbr.rel (%p244) target = $region32
        $region31: #{tpu_custom_call.1} parent=11 // pred_region
          %s248 = ssub.s32 4096, 4096
          %249 = vsyncadd [#allocation9], %s248
          %s250 = sshll.u32 [#allocation8], 4
          %s251 = int_to_ptr.vmem [resolvable:$true] %s250
          %256 = dma.hbm_to_vmem [thread:$0]  %s5, 4096, %s251, [#allocation9], 128, 128, 8
        $region32: #{tpu_custom_call.1} parent=11 // pred_fallthru
          _
        // Predicated region
        $region33: #{tpu_custom_call.1} parent=11 // pred_check
          %p257 = pneg %p173
        $region34: #{tpu_custom_call.1} parent=11 // pred_check_branch
          %259 = sbr.rel (%p257) target = $region36
        $region35: #{tpu_custom_call.1} parent=11 // pred_region
          _
        $region36: #{tpu_custom_call.1} parent=11 // pred_fallthru
          _
      $region12: #{tpu_custom_call.1} parent=5 // pred_fallthru
        _
      %p260 = scmp.lt.s32.totalorder %s21, 2
      // Predicated region
      $region37: #{tpu_custom_call.1} parent=5 // pred_check
        %p261 = pneg %p260
      $region38: #{tpu_custom_call.1} parent=5 // pred_check_branch
        %263 = sbr.rel (%p261) target = $region40
      $region39: #{tpu_custom_call.1} parent=5 // pred_region
        // Predicated region
        $region41: #{tpu_custom_call.1} parent=39 // pred_check
          %p264 = pneg %p41
        $region42: #{tpu_custom_call.1} parent=39 // pred_check_branch
          %266 = sbr.rel (%p264) target = $region44
        $region43: #{tpu_custom_call.1} parent=39 // pred_region
          %s267 = sand.u32 %s31, 1
          %s268 = scalar_lea.sflag [#allocation3], %s267
          %s269 = sand.u32 %s31, 1
          %s270 = smul.addr %s269, 256
          %s271 = scalar_lea.vmem [#allocation2], %s270
          %s272 = smul.u32 32, %s21
          %s274 = ssub.s32 4096, 4096
          %275 = vsyncadd %s268, %s274
          %s276 = smul.addr %s272, 128
          %s277 = scalar_lea.hbm %s0, %s276
          %s278 = sshll.u32 %s271, 4
          %s279 = int_to_ptr.vmem [resolvable:$true] %s278
          %284 = dma.hbm_to_vmem [thread:$0]  %s277, 4096, %s279, %s268, 128, 128, 8
        $region44: #{tpu_custom_call.1} parent=39 // pred_fallthru
          _
      $region40: #{tpu_custom_call.1} parent=5 // pred_fallthru
        _
      %p285 = scmp.le.s32.totalorder 1, %s21
      %p286 = scmp.lt.s32.totalorder %s21, 3
      %p287 = pnand %p285, %p286
      %p288 = pneg %p287
      // Predicated region
      $region45: #{tpu_custom_call.1} parent=5 // pred_check
        _
      $region46: #{tpu_custom_call.1} parent=5 // pred_check_branch
        %290 = sbr.rel (%p287) target = $region48
      $region47: #{tpu_custom_call.1} parent=5 // pred_region
        %s291 = ssub.s32 %s21, 1
        %s292 = sand.u32 %s34, 1
        %s293 = scalar_lea.sflag [#allocation3], %s292
        %s294 = sand.u32 %s34, 1
        %s295 = smul.addr %s294, 256
        %s296 = scalar_lea.vmem [#allocation2], %s295
        // Predicated region
        $region49: #{tpu_custom_call.1} parent=47 // pred_check
          %p297 = pneg %p47
        $region50: #{tpu_custom_call.1} parent=47 // pred_check_branch
          %299 = sbr.rel (%p297) target = $region52
        $region51: #{tpu_custom_call.1} parent=47 // pred_region
          %300 = dma.done %s293, 4096
        $region52: #{tpu_custom_call.1} parent=47 // pred_fallthru
          _
        // Predicated region
        $region53: #{tpu_custom_call.1} parent=47 // pred_check
          %p301 = pneg %p89
        $region54: #{tpu_custom_call.1} parent=47 // pred_check_branch
          %303 = sbr.rel (%p301) target = $region56
        $region55: #{tpu_custom_call.1} parent=47 // pred_region
          %304 = dma.done [#allocation6], 16
        $region56: #{tpu_custom_call.1} parent=47 // pred_fallthru
          _
        // Predicated region
        $region57: #{tpu_custom_call.1} parent=47 // pred_check
          %p305 = pneg %p110
        $region58: #{tpu_custom_call.1} parent=47 // pred_check_branch
          %307 = sbr.rel (%p305) target = $region60
        $region59: #{tpu_custom_call.1} parent=47 // pred_region
          %308 = dma.done [#allocation6], 4096
        $region60: #{tpu_custom_call.1} parent=47 // pred_fallthru
          _
        // Predicated region
        $region61: #{tpu_custom_call.1} parent=47 // pred_check
          %p309 = pneg %p152
        $region62: #{tpu_custom_call.1} parent=47 // pred_check_branch
          %311 = sbr.rel (%p309) target = $region64
        $region63: #{tpu_custom_call.1} parent=47 // pred_region
          %312 = dma.done [#allocation9], 4096
        $region64: #{tpu_custom_call.1} parent=47 // pred_fallthru
          _
        %s313 = sand.u32 %s34, 1
        %s314 = scalar_lea.sflag [#allocation3], %s313
        %s315 = sand.u32 %s34, 1
        %s316 = smul.addr %s315, 256
        %s317 = scalar_lea.vmem [#allocation2], %s316
        %p318 = pneg %p47
        %p319 = pneg %p44
        %p320 = pneg %p68
        %p321 = pneg %p65
        %p322 = pneg %p89
        %p323 = pneg %p86
        %p324 = pneg %p110
        %p325 = pneg %p107
        %p326 = pneg %p131
        %p327 = pneg %p128
        %p328 = pneg %p152
        %p329 = pneg %p149
        %p330 = pneg %p173
        %p331 = pneg %p170
        %p332 = pneg %p199
        %p333 = pneg %p196
        %s334 = sand.u32 %s186, 1
        %s335 = scalar_lea.sflag [#allocation4], %s334
        %s336 = sand.u32 %s186, 1
        %s337 = smul.addr %s336, 256
        %s338 = scalar_lea.vmem [#allocation10], %s337
        %s339 = smul.u32 32, %s26
        %s340 = smul.u32 32, %s26
        %v341 = vld [vmem:[%s296] sm:$0xff]
        %v342 = vld [vmem:[%s296 + $0x8] sm:$0xff]
        %v343 = vld [vmem:[%s296 + $0x10] sm:$0xff]
        %v344 = vld [vmem:[%s296 + $0x18] sm:$0xff]
        %v345 = vld [vmem:[%s296 + $0x20] sm:$0xff]
        %v346 = vld [vmem:[%s296 + $0x28] sm:$0xff]
        %v347 = vld [vmem:[%s296 + $0x30] sm:$0xff]
        %v348 = vld [vmem:[%s296 + $0x38] sm:$0xff]
        %v349 = vld [vmem:[%s296 + $0x40] sm:$0xff]
        %v350 = vld [vmem:[%s296 + $0x48] sm:$0xff]
        %v351 = vld [vmem:[%s296 + $0x50] sm:$0xff]
        %v352 = vld [vmem:[%s296 + $0x58] sm:$0xff]
        %v353 = vld [vmem:[%s296 + $0x60] sm:$0xff]
        %v354 = vld [vmem:[%s296 + $0x68] sm:$0xff]
        %v355 = vld [vmem:[%s296 + $0x70] sm:$0xff]
        %v356 = vld [vmem:[%s296 + $0x78] sm:$0xff]
        %v357 = vld [vmem:[%s296 + $0x80] sm:$0xff]
        %v358 = vld [vmem:[%s296 + $0x88] sm:$0xff]
        %v359 = vld [vmem:[%s296 + $0x90] sm:$0xff]
        %v360 = vld [vmem:[%s296 + $0x98] sm:$0xff]
        %v361 = vld [vmem:[%s296 + $0xa0] sm:$0xff]
        %v362 = vld [vmem:[%s296 + $0xa8] sm:$0xff]
        %v363 = vld [vmem:[%s296 + $0xb0] sm:$0xff]
        %v364 = vld [vmem:[%s296 + $0xb8] sm:$0xff]
        %v365 = vld [vmem:[%s296 + $0xc0] sm:$0xff]
        %v366 = vld [vmem:[%s296 + $0xc8] sm:$0xff]
        %v367 = vld [vmem:[%s296 + $0xd0] sm:$0xff]
        %v368 = vld [vmem:[%s296 + $0xd8] sm:$0xff]
        %v369 = vld [vmem:[%s296 + $0xe0] sm:$0xff]
        %v370 = vld [vmem:[%s296 + $0xe8] sm:$0xff]
        %v371 = vld [vmem:[%s296 + $0xf0] sm:$0xff]
        %v372 = vld [vmem:[%s296 + $0xf8] sm:$0xff]
        %373 = vadd.xlane.f32.xlu0 %v341
        %v374 = vpop.xlane.xlu0 %373
        %375 = vadd.xlane.f32.xlu0 %v342
        %v376 = vpop.xlane.xlu0 %375
        %377 = vadd.xlane.f32.xlu0 %v343
        %v378 = vpop.xlane.xlu0 %377
        %379 = vadd.xlane.f32.xlu0 %v344
        %v380 = vpop.xlane.xlu0 %379
        %381 = vadd.xlane.f32.xlu0 %v345
        %v382 = vpop.xlane.xlu0 %381
        %383 = vadd.xlane.f32.xlu0 %v346
        %v384 = vpop.xlane.xlu0 %383
        %385 = vadd.xlane.f32.xlu0 %v347
        %v386 = vpop.xlane.xlu0 %385
        %387 = vadd.xlane.f32.xlu0 %v348
        %v388 = vpop.xlane.xlu0 %387
        %389 = vadd.xlane.f32.xlu0 %v349
        %v390 = vpop.xlane.xlu0 %389
        %391 = vadd.xlane.f32.xlu0 %v350
        %v392 = vpop.xlane.xlu0 %391
        %393 = vadd.xlane.f32.xlu0 %v351
        %v394 = vpop.xlane.xlu0 %393
        %395 = vadd.xlane.f32.xlu0 %v352
        %v396 = vpop.xlane.xlu0 %395
        %397 = vadd.xlane.f32.xlu0 %v353
        %v398 = vpop.xlane.xlu0 %397
        %399 = vadd.xlane.f32.xlu0 %v354
        %v400 = vpop.xlane.xlu0 %399
        %401 = vadd.xlane.f32.xlu0 %v355
        %v402 = vpop.xlane.xlu0 %401
        %403 = vadd.xlane.f32.xlu0 %v356
        %v404 = vpop.xlane.xlu0 %403
        %405 = vadd.xlane.f32.xlu0 %v357
        %v406 = vpop.xlane.xlu0 %405
        %407 = vadd.xlane.f32.xlu0 %v358
        %v408 = vpop.xlane.xlu0 %407
        %409 = vadd.xlane.f32.xlu0 %v359
        %v410 = vpop.xlane.xlu0 %409
        %411 = vadd.xlane.f32.xlu0 %v360
        %v412 = vpop.xlane.xlu0 %411
        %413 = vadd.xlane.f32.xlu0 %v361
        %v414 = vpop.xlane.xlu0 %413
        %415 = vadd.xlane.f32.xlu0 %v362
        %v416 = vpop.xlane.xlu0 %415
        %417 = vadd.xlane.f32.xlu0 %v363
        %v418 = vpop.xlane.xlu0 %417
        %419 = vadd.xlane.f32.xlu0 %v364
        %v420 = vpop.xlane.xlu0 %419
        %421 = vadd.xlane.f32.xlu0 %v365
        %v422 = vpop.xlane.xlu0 %421
        %423 = vadd.xlane.f32.xlu0 %v366
        %v424 = vpop.xlane.xlu0 %423
        %425 = vadd.xlane.f32.xlu0 %v367
        %v426 = vpop.xlane.xlu0 %425
        %427 = vadd.xlane.f32.xlu0 %v368
        %v428 = vpop.xlane.xlu0 %427
        %429 = vadd.xlane.f32.xlu0 %v369
        %v430 = vpop.xlane.xlu0 %429
        %431 = vadd.xlane.f32.xlu0 %v370
        %v432 = vpop.xlane.xlu0 %431
        %433 = vadd.xlane.f32.xlu0 %v371
        %v434 = vpop.xlane.xlu0 %433
        %435 = vadd.xlane.f32.xlu0 %v372
        %v436 = vpop.xlane.xlu0 %435
        %v437 = vrcp.pop 128.0
        %v438 = vmul.f32 %v374, %v437
        %v439 = vmul.f32 %v376, %v437
        %v440 = vmul.f32 %v378, %v437
        %v441 = vmul.f32 %v380, %v437
        %v442 = vmul.f32 %v382, %v437
        %v443 = vmul.f32 %v384, %v437
        %v444 = vmul.f32 %v386, %v437
        %v445 = vmul.f32 %v388, %v437
        %v446 = vmul.f32 %v390, %v437
        %v447 = vmul.f32 %v392, %v437
        %v448 = vmul.f32 %v394, %v437
        %v449 = vmul.f32 %v396, %v437
        %v450 = vmul.f32 %v398, %v437
        %v451 = vmul.f32 %v400, %v437
        %v452 = vmul.f32 %v402, %v437
        %v453 = vmul.f32 %v404, %v437
        %v454 = vmul.f32 %v406, %v437
        %v455 = vmul.f32 %v408, %v437
        %v456 = vmul.f32 %v410, %v437
        %v457 = vmul.f32 %v412, %v437
        %v458 = vmul.f32 %v414, %v437
        %v459 = vmul.f32 %v416, %v437
        %v460 = vmul.f32 %v418, %v437
        %v461 = vmul.f32 %v420, %v437
        %v462 = vmul.f32 %v422, %v437
        %v463 = vmul.f32 %v424, %v437
        %v464 = vmul.f32 %v426, %v437
        %v465 = vmul.f32 %v428, %v437
        %v466 = vmul.f32 %v430, %v437
        %v467 = vmul.f32 %v432, %v437
        %v468 = vmul.f32 %v434, %v437
        %v469 = vmul.f32 %v436, %v437
        %v470 = vsub.f32 %v341, %v438
        %v471 = vsub.f32 %v342, %v439
        %v472 = vsub.f32 %v343, %v440
        %v473 = vsub.f32 %v344, %v441
        %v474 = vsub.f32 %v345, %v442
        %v475 = vsub.f32 %v346, %v443
        %v476 = vsub.f32 %v347, %v444
        %v477 = vsub.f32 %v348, %v445
        %v478 = vsub.f32 %v349, %v446
        %v479 = vsub.f32 %v350, %v447
        %v480 = vsub.f32 %v351, %v448
        %v481 = vsub.f32 %v352, %v449
        %v482 = vsub.f32 %v353, %v450
        %v483 = vsub.f32 %v354, %v451
        %v484 = vsub.f32 %v355, %v452
        %v485 = vsub.f32 %v356, %v453
        %v486 = vsub.f32 %v357, %v454
        %v487 = vsub.f32 %v358, %v455
        %v488 = vsub.f32 %v359, %v456
        %v489 = vsub.f32 %v360, %v457
        %v490 = vsub.f32 %v361, %v458
        %v491 = vsub.f32 %v362, %v459
        %v492 = vsub.f32 %v363, %v460
        %v493 = vsub.f32 %v364, %v461
        %v494 = vsub.f32 %v365, %v462
        %v495 = vsub.f32 %v366, %v463
        %v496 = vsub.f32 %v367, %v464
        %v497 = vsub.f32 %v368, %v465
        %v498 = vsub.f32 %v369, %v466
        %v499 = vsub.f32 %v370, %v467
        %v500 = vsub.f32 %v371, %v468
        %v501 = vsub.f32 %v372, %v469
        %v502 = vmul.f32 %v470, %v470
        %v503 = vmul.f32 %v471, %v471
        %v504 = vmul.f32 %v472, %v472
        %v505 = vmul.f32 %v473, %v473
        %v506 = vmul.f32 %v474, %v474
        %v507 = vmul.f32 %v475, %v475
        %v508 = vmul.f32 %v476, %v476
        %v509 = vmul.f32 %v477, %v477
        %v510 = vmul.f32 %v478, %v478
        %v511 = vmul.f32 %v479, %v479
        %v512 = vmul.f32 %v480, %v480
        %v513 = vmul.f32 %v481, %v481
        %v514 = vmul.f32 %v482, %v482
        %v515 = vmul.f32 %v483, %v483
        %v516 = vmul.f32 %v484, %v484
        %v517 = vmul.f32 %v485, %v485
        %v518 = vmul.f32 %v486, %v486
        %v519 = vmul.f32 %v487, %v487
        %v520 = vmul.f32 %v488, %v488
        %v521 = vmul.f32 %v489, %v489
        %v522 = vmul.f32 %v490, %v490
        %v523 = vmul.f32 %v491, %v491
        %v524 = vmul.f32 %v492, %v492
        %v525 = vmul.f32 %v493, %v493
        %v526 = vmul.f32 %v494, %v494
        %v527 = vmul.f32 %v495, %v495
        %v528 = vmul.f32 %v496, %v496
        %v529 = vmul.f32 %v497, %v497
        %v530 = vmul.f32 %v498, %v498
        %v531 = vmul.f32 %v499, %v499
        %v532 = vmul.f32 %v500, %v500
        %v533 = vmul.f32 %v501, %v501
        %534 = vadd.xlane.f32.xlu0 %v502
        %v535 = vpop.xlane.xlu0 %534
        %536 = vadd.xlane.f32.xlu0 %v503
        %v537 = vpop.xlane.xlu0 %536
        %538 = vadd.xlane.f32.xlu0 %v504
        %v539 = vpop.xlane.xlu0 %538
        %540 = vadd.xlane.f32.xlu0 %v505
        %v541 = vpop.xlane.xlu0 %540
        %542 = vadd.xlane.f32.xlu0 %v506
        %v543 = vpop.xlane.xlu0 %542
        %544 = vadd.xlane.f32.xlu0 %v507
        %v545 = vpop.xlane.xlu0 %544
        %546 = vadd.xlane.f32.xlu0 %v508
        %v547 = vpop.xlane.xlu0 %546
        %548 = vadd.xlane.f32.xlu0 %v509
        %v549 = vpop.xlane.xlu0 %548
        %550 = vadd.xlane.f32.xlu0 %v510
        %v551 = vpop.xlane.xlu0 %550
        %552 = vadd.xlane.f32.xlu0 %v511
        %v553 = vpop.xlane.xlu0 %552
        %554 = vadd.xlane.f32.xlu0 %v512
        %v555 = vpop.xlane.xlu0 %554
        %556 = vadd.xlane.f32.xlu0 %v513
        %v557 = vpop.xlane.xlu0 %556
        %558 = vadd.xlane.f32.xlu0 %v514
        %v559 = vpop.xlane.xlu0 %558
        %560 = vadd.xlane.f32.xlu0 %v515
        %v561 = vpop.xlane.xlu0 %560
        %562 = vadd.xlane.f32.xlu0 %v516
        %v563 = vpop.xlane.xlu0 %562
        %564 = vadd.xlane.f32.xlu0 %v517
        %v565 = vpop.xlane.xlu0 %564
        %566 = vadd.xlane.f32.xlu0 %v518
        %v567 = vpop.xlane.xlu0 %566
        %568 = vadd.xlane.f32.xlu0 %v519
        %v569 = vpop.xlane.xlu0 %568
        %570 = vadd.xlane.f32.xlu0 %v520
        %v571 = vpop.xlane.xlu0 %570
        %572 = vadd.xlane.f32.xlu0 %v521
        %v573 = vpop.xlane.xlu0 %572
        %574 = vadd.xlane.f32.xlu0 %v522
        %v575 = vpop.xlane.xlu0 %574
        %576 = vadd.xlane.f32.xlu0 %v523
        %v577 = vpop.xlane.xlu0 %576
        %578 = vadd.xlane.f32.xlu0 %v524
        %v579 = vpop.xlane.xlu0 %578
        %580 = vadd.xlane.f32.xlu0 %v525
        %v581 = vpop.xlane.xlu0 %580
        %582 = vadd.xlane.f32.xlu0 %v526
        %v583 = vpop.xlane.xlu0 %582
        %584 = vadd.xlane.f32.xlu0 %v527
        %v585 = vpop.xlane.xlu0 %584
        %586 = vadd.xlane.f32.xlu0 %v528
        %v587 = vpop.xlane.xlu0 %586
        %588 = vadd.xlane.f32.xlu0 %v529
        %v589 = vpop.xlane.xlu0 %588
        %590 = vadd.xlane.f32.xlu0 %v530
        %v591 = vpop.xlane.xlu0 %590
        %592 = vadd.xlane.f32.xlu0 %v531
        %v593 = vpop.xlane.xlu0 %592
        %594 = vadd.xlane.f32.xlu0 %v532
        %v595 = vpop.xlane.xlu0 %594
        %596 = vadd.xlane.f32.xlu0 %v533
        %v597 = vpop.xlane.xlu0 %596
        %v598 = vmul.f32 %v535, %v437
        %v599 = vmul.f32 %v537, %v437
        %v600 = vmul.f32 %v539, %v437
        %v601 = vmul.f32 %v541, %v437
        %v602 = vmul.f32 %v543, %v437
        %v603 = vmul.f32 %v545, %v437
        %v604 = vmul.f32 %v547, %v437
        %v605 = vmul.f32 %v549, %v437
        %v606 = vmul.f32 %v551, %v437
        %v607 = vmul.f32 %v553, %v437
        %v608 = vmul.f32 %v555, %v437
        %v609 = vmul.f32 %v557, %v437
        %v610 = vmul.f32 %v559, %v437
        %v611 = vmul.f32 %v561, %v437
        %v612 = vmul.f32 %v563, %v437
        %v613 = vmul.f32 %v565, %v437
        %v614 = vmul.f32 %v567, %v437
        %v615 = vmul.f32 %v569, %v437
        %v616 = vmul.f32 %v571, %v437
        %v617 = vmul.f32 %v573, %v437
        %v618 = vmul.f32 %v575, %v437
        %v619 = vmul.f32 %v577, %v437
        %v620 = vmul.f32 %v579, %v437
        %v621 = vmul.f32 %v581, %v437
        %v622 = vmul.f32 %v583, %v437
        %v623 = vmul.f32 %v585, %v437
        %v624 = vmul.f32 %v587, %v437
        %v625 = vmul.f32 %v589, %v437
        %v626 = vmul.f32 %v591, %v437
        %v627 = vmul.f32 %v593, %v437
        %v628 = vmul.f32 %v595, %v437
        %v629 = vmul.f32 %v597, %v437
        %v630 = vadd.f32 %v598, 1e-05
        %v631 = vadd.f32 %v599, 1e-05
        %v632 = vadd.f32 %v600, 1e-05
        %v633 = vadd.f32 %v601, 1e-05
        %v634 = vadd.f32 %v602, 1e-05
        %v635 = vadd.f32 %v603, 1e-05
        %v636 = vadd.f32 %v604, 1e-05
        %v637 = vadd.f32 %v605, 1e-05
        %v638 = vadd.f32 %v606, 1e-05
        %v639 = vadd.f32 %v607, 1e-05
        %v640 = vadd.f32 %v608, 1e-05
        %v641 = vadd.f32 %v609, 1e-05
        %v642 = vadd.f32 %v610, 1e-05
        %v643 = vadd.f32 %v611, 1e-05
        %v644 = vadd.f32 %v612, 1e-05
        %v645 = vadd.f32 %v613, 1e-05
        %v646 = vadd.f32 %v614, 1e-05
        %v647 = vadd.f32 %v615, 1e-05
        %v648 = vadd.f32 %v616, 1e-05
        %v649 = vadd.f32 %v617, 1e-05
        %v650 = vadd.f32 %v618, 1e-05
        %v651 = vadd.f32 %v619, 1e-05
        %v652 = vadd.f32 %v620, 1e-05
        %v653 = vadd.f32 %v621, 1e-05
        %v654 = vadd.f32 %v622, 1e-05
        %v655 = vadd.f32 %v623, 1e-05
        %v656 = vadd.f32 %v624, 1e-05
        %v657 = vadd.f32 %v625, 1e-05
        %v658 = vadd.f32 %v626, 1e-05
        %v659 = vadd.f32 %v627, 1e-05
        %v660 = vadd.f32 %v628, 1e-05
        %v661 = vadd.f32 %v629, 1e-05
        %v662 = vrsqrt.pop %v630
        %v663 = vrsqrt.pop %v631
        %v664 = vrsqrt.pop %v632
        %v665 = vrsqrt.pop %v633
        %v666 = vrsqrt.pop %v634
        %v667 = vrsqrt.pop %v635
        %v668 = vrsqrt.pop %v636
        %v669 = vrsqrt.pop %v637
        %v670 = vrsqrt.pop %v638
        %v671 = vrsqrt.pop %v639
        %v672 = vrsqrt.pop %v640
        %v673 = vrsqrt.pop %v641
        %v674 = vrsqrt.pop %v642
        %v675 = vrsqrt.pop %v643
        %v676 = vrsqrt.pop %v644
        %v677 = vrsqrt.pop %v645
        %v678 = vrsqrt.pop %v646
        %v679 = vrsqrt.pop %v647
        %v680 = vrsqrt.pop %v648
        %v681 = vrsqrt.pop %v649
        %v682 = vrsqrt.pop %v650
        %v683 = vrsqrt.pop %v651
        %v684 = vrsqrt.pop %v652
        %v685 = vrsqrt.pop %v653
        %v686 = vrsqrt.pop %v654
        %v687 = vrsqrt.pop %v655
        %v688 = vrsqrt.pop %v656
        %v689 = vrsqrt.pop %v657
        %v690 = vrsqrt.pop %v658
        %v691 = vrsqrt.pop %v659
        %v692 = vrsqrt.pop %v660
        %v693 = vrsqrt.pop %v661
        %v694 = vmul.f32 %v470, %v662
        %v695 = vmul.f32 %v471, %v663
        %v696 = vmul.f32 %v472, %v664
        %v697 = vmul.f32 %v473, %v665
        %v698 = vmul.f32 %v474, %v666
        %v699 = vmul.f32 %v475, %v667
        %v700 = vmul.f32 %v476, %v668
        %v701 = vmul.f32 %v477, %v669
        %v702 = vmul.f32 %v478, %v670
        %v703 = vmul.f32 %v479, %v671
        %v704 = vmul.f32 %v480, %v672
        %v705 = vmul.f32 %v481, %v673
        %v706 = vmul.f32 %v482, %v674
        %v707 = vmul.f32 %v483, %v675
        %v708 = vmul.f32 %v484, %v676
        %v709 = vmul.f32 %v485, %v677
        %v710 = vmul.f32 %v486, %v678
        %v711 = vmul.f32 %v487, %v679
        %v712 = vmul.f32 %v488, %v680
        %v713 = vmul.f32 %v489, %v681
        %v714 = vmul.f32 %v490, %v682
        %v715 = vmul.f32 %v491, %v683
        %v716 = vmul.f32 %v492, %v684
        %v717 = vmul.f32 %v493, %v685
        %v718 = vmul.f32 %v494, %v686
        %v719 = vmul.f32 %v495, %v687
        %v720 = vmul.f32 %v496, %v688
        %v721 = vmul.f32 %v497, %v689
        %v722 = vmul.f32 %v498, %v690
        %v723 = vmul.f32 %v499, %v691
        %v724 = vmul.f32 %v500, %v692
        %v725 = vmul.f32 %v501, %v693
        %v726 = vld [vmem:[%s1] sm:$0x1]
        %v728 = vlaneseq
        %v729 = vshrl.u32 %v728, 7
        %v730 = vsub.s32 0, %v729
        %v731 = vrot.slane %v726, %v730
        %v733 = vmul.f32 %v694, %v731
        %v734 = vmul.f32 %v695, %v731
        %v735 = vmul.f32 %v696, %v731
        %v736 = vmul.f32 %v697, %v731
        %v737 = vmul.f32 %v698, %v731
        %v738 = vmul.f32 %v699, %v731
        %v739 = vmul.f32 %v700, %v731
        %v740 = vmul.f32 %v701, %v731
        %v741 = vmul.f32 %v702, %v731
        %v742 = vmul.f32 %v703, %v731
        %v743 = vmul.f32 %v704, %v731
        %v744 = vmul.f32 %v705, %v731
        %v745 = vmul.f32 %v706, %v731
        %v746 = vmul.f32 %v707, %v731
        %v747 = vmul.f32 %v708, %v731
        %v748 = vmul.f32 %v709, %v731
        %v749 = vmul.f32 %v710, %v731
        %v750 = vmul.f32 %v711, %v731
        %v751 = vmul.f32 %v712, %v731
        %v752 = vmul.f32 %v713, %v731
        %v753 = vmul.f32 %v714, %v731
        %v754 = vmul.f32 %v715, %v731
        %v755 = vmul.f32 %v716, %v731
        %v756 = vmul.f32 %v717, %v731
        %v757 = vmul.f32 %v718, %v731
        %v758 = vmul.f32 %v719, %v731
        %v759 = vmul.f32 %v720, %v731
        %v760 = vmul.f32 %v721, %v731
        %v761 = vmul.f32 %v722, %v731
        %v762 = vmul.f32 %v723, %v731
        %v763 = vmul.f32 %v724, %v731
        %v764 = vmul.f32 %v725, %v731
        %v765 = vld [vmem:[#allocation5] sm:$0x1]
        %v767 = vlaneseq
        %v768 = vshrl.u32 %v767, 7
        %v769 = vsub.s32 0, %v768
        %v770 = vrot.slane %v765, %v769
        %v772 = vadd.f32 %v733, %v770
        %v773 = vadd.f32 %v734, %v770
        %v774 = vadd.f32 %v735, %v770
        %v775 = vadd.f32 %v736, %v770
        %v776 = vadd.f32 %v737, %v770
        %v777 = vadd.f32 %v738, %v770
        %v778 = vadd.f32 %v739, %v770
        %v779 = vadd.f32 %v740, %v770
        %v780 = vadd.f32 %v741, %v770
        %v781 = vadd.f32 %v742, %v770
        %v782 = vadd.f32 %v743, %v770
        %v783 = vadd.f32 %v744, %v770
        %v784 = vadd.f32 %v745, %v770
        %v785 = vadd.f32 %v746, %v770
        %v786 = vadd.f32 %v747, %v770
        %v787 = vadd.f32 %v748, %v770
        %v788 = vadd.f32 %v749, %v770
        %v789 = vadd.f32 %v750, %v770
        %v790 = vadd.f32 %v751, %v770
        %v791 = vadd.f32 %v752, %v770
        %v792 = vadd.f32 %v753, %v770
        %v793 = vadd.f32 %v754, %v770
        %v794 = vadd.f32 %v755, %v770
        %v795 = vadd.f32 %v756, %v770
        %v796 = vadd.f32 %v757, %v770
        %v797 = vadd.f32 %v758, %v770
        %v798 = vadd.f32 %v759, %v770
        %v799 = vadd.f32 %v760, %v770
        %v800 = vadd.f32 %v761, %v770
        %v801 = vadd.f32 %v762, %v770
        %v802 = vadd.f32 %v763, %v770
        %v803 = vadd.f32 %v764, %v770
        %v804 = vld [vmem:[#allocation7] sm:$0xff]
        %v805 = vld [vmem:[#allocation7 + $0x8] sm:$0xff]
        %v806 = vld [vmem:[#allocation7 + $0x10] sm:$0xff]
        %v807 = vld [vmem:[#allocation7 + $0x18] sm:$0xff]
        %v808 = vld [vmem:[#allocation7 + $0x20] sm:$0xff]
        %v809 = vld [vmem:[#allocation7 + $0x28] sm:$0xff]
        %v810 = vld [vmem:[#allocation7 + $0x30] sm:$0xff]
        %v811 = vld [vmem:[#allocation7 + $0x38] sm:$0xff]
        %v812 = vld [vmem:[#allocation7 + $0x40] sm:$0xff]
        %v813 = vld [vmem:[#allocation7 + $0x48] sm:$0xff]
        %v814 = vld [vmem:[#allocation7 + $0x50] sm:$0xff]
        %v815 = vld [vmem:[#allocation7 + $0x58] sm:$0xff]
        %v816 = vld [vmem:[#allocation7 + $0x60] sm:$0xff]
        %v817 = vld [vmem:[#allocation7 + $0x68] sm:$0xff]
        %v818 = vld [vmem:[#allocation7 + $0x70] sm:$0xff]
        %v819 = vld [vmem:[#allocation7 + $0x78] sm:$0xff]
        %v820 = vld [vmem:[#allocation7 + $0x80] sm:$0xff]
        %v821 = vld [vmem:[#allocation7 + $0x88] sm:$0xff]
        %v822 = vld [vmem:[#allocation7 + $0x90] sm:$0xff]
        %v823 = vld [vmem:[#allocation7 + $0x98] sm:$0xff]
        %v824 = vld [vmem:[#allocation7 + $0xa0] sm:$0xff]
        %v825 = vld [vmem:[#allocation7 + $0xa8] sm:$0xff]
        %v826 = vld [vmem:[#allocation7 + $0xb0] sm:$0xff]
        %v827 = vld [vmem:[#allocation7 + $0xb8] sm:$0xff]
        %v828 = vld [vmem:[#allocation7 + $0xc0] sm:$0xff]
        %v829 = vld [vmem:[#allocation7 + $0xc8] sm:$0xff]
        %v830 = vld [vmem:[#allocation7 + $0xd0] sm:$0xff]
        %v831 = vld [vmem:[#allocation7 + $0xd8] sm:$0xff]
        %v832 = vld [vmem:[#allocation7 + $0xe0] sm:$0xff]
        %v833 = vld [vmem:[#allocation7 + $0xe8] sm:$0xff]
        %v834 = vld [vmem:[#allocation7 + $0xf0] sm:$0xff]
        %v835 = vld [vmem:[#allocation7 + $0xf8] sm:$0xff]
        %v836 = vld [vmem:[%s4] sm:$0x3]
        %v838 = vlaneseq
        %v839 = vshrl.u32 %v838, 7
        %v840 = vsub.s32 0, %v839
        %v841 = vrot.slane %v836, %v840
        %v842 = vlaneseq
        %v843 = vshrl.u32 %v842, 7
        %v844 = vsub.s32 1, %v843
        %v845 = vrot.slane %v836, %v844
        %848 = vmatprep.subr.mxu0 %v835
        %849 = vmatpush1.msra.mxu0 %v834
        %850 = vmatprep.subr.mxu0 %v833
        %851 = vmatpush1.msra.mxu0 %v832
        %852 = vmatprep.subr.mxu0 %v831
        %853 = vmatpush1.msra.mxu0 %v830
        %854 = vmatprep.subr.mxu0 %v829
        %855 = vmatpush1.msra.mxu0 %v828
        %856 = vmatprep.subr.mxu0 %v827
        %857 = vmatpush1.msra.mxu0 %v826
        %858 = vmatprep.subr.mxu0 %v825
        %859 = vmatpush1.msra.mxu0 %v824
        %860 = vmatprep.subr.mxu0 %v823
        %861 = vmatpush1.msra.mxu0 %v822
        %862 = vmatprep.subr.mxu0 %v821
        %863 = vmatpush1.msra.mxu0 %v820
        %864 = vmatprep.subr.mxu0 %v819
        %865 = vmatpush1.msra.mxu0 %v818
        %866 = vmatprep.subr.mxu0 %v817
        %867 = vmatpush1.msra.mxu0 %v816
        %868 = vmatprep.subr.mxu0 %v815
        %869 = vmatpush1.msra.mxu0 %v814
        %870 = vmatprep.subr.mxu0 %v813
        %871 = vmatpush1.msra.mxu0 %v812
        %872 = vmatprep.subr.mxu0 %v811
        %873 = vmatpush1.msra.mxu0 %v810
        %874 = vmatprep.subr.mxu0 %v809
        %875 = vmatpush1.msra.mxu0 %v808
        %876 = vmatprep.subr.mxu0 %v807
        %877 = vmatpush1.msra.mxu0 %v806
        %878 = vmatprep.subr.mxu0 %v805
        %879 = vmatpush1.msra.mxu0 %v804
        %880 = vmatprep.subr.mxu0 0.0
        %881 = vmatpush2.msra.mxu0 0.0
        %882 = vmatprep.subr.mxu0 0.0
        %883 = vmatpush2.msra.mxu0 0.0
        %884 = vmatprep.subr.mxu0 0.0
        %885 = vmatpush2.msra.mxu0 0.0
        %886 = vmatprep.subr.mxu0 0.0
        %887 = vmatpush2.msra.mxu0 0.0
        %888 = vmatprep.subr.mxu0 0.0
        %889 = vmatpush2.msra.mxu0 0.0
        %890 = vmatprep.subr.mxu0 0.0
        %891 = vmatpush2.msra.mxu0 0.0
        %892 = vmatprep.subr.mxu0 0.0
        %893 = vmatpush2.msra.mxu0 0.0
        %894 = vmatprep.subr.mxu0 0.0
        %895 = vmatpush2.msra.mxu0 0.0
        %896 = vmatprep.subr.mxu0 0.0
        %897 = vmatpush2.msra.mxu0 0.0
        %898 = vmatprep.subr.mxu0 0.0
        %899 = vmatpush2.msra.mxu0 0.0
        %900 = vmatprep.subr.mxu0 0.0
        %901 = vmatpush2.msra.mxu0 0.0
        %902 = vmatprep.subr.mxu0 0.0
        %903 = vmatpush2.msra.mxu0 0.0
        %904 = vmatprep.subr.mxu0 0.0
        %905 = vmatpush2.msra.mxu0 0.0
        %906 = vmatprep.subr.mxu0 0.0
        %907 = vmatpush2.msra.mxu0 0.0
        %908 = vmatprep.subr.mxu0 0.0
        %909 = vmatpush2.msra.mxu0 0.0
        %910 = vmatprep.subr.mxu0 0.0
        %911 = vmatpush2.msra.mxu0 0.0
        %912 = vmatprep.mubr.f32.mxu0 0.0
        %913 = vmatmul.mubr.f32.gmra.mxu0 %v772
        %v914 = vpop.f32.mrf.mxu0
        %v915 = vadd.f32 %v841, %v914
        %v916 = vpop.f32.mrf.mxu0
        %v917 = vadd.f32 %v845, %v916
        %918 = vmatprep.mubr.f32.mxu0 0.0
        %919 = vmatmul.mubr.f32.gmra.mxu0 %v773
        %v920 = vpop.f32.mrf.mxu0
        %v921 = vadd.f32 %v841, %v920
        %v922 = vpop.f32.mrf.mxu0
        %v923 = vadd.f32 %v845, %v922
        %924 = vmatprep.mubr.f32.mxu0 0.0
        %925 = vmatmul.mubr.f32.gmra.mxu0 %v774
        %v926 = vpop.f32.mrf.mxu0
        %v927 = vadd.f32 %v841, %v926
        %v928 = vpop.f32.mrf.mxu0
        %v929 = vadd.f32 %v845, %v928
        %930 = vmatprep.mubr.f32.mxu0 0.0
        %931 = vmatmul.mubr.f32.gmra.mxu0 %v775
        %v932 = vpop.f32.mrf.mxu0
        %v933 = vadd.f32 %v841, %v932
        %v934 = vpop.f32.mrf.mxu0
        %v935 = vadd.f32 %v845, %v934
        %936 = vmatprep.mubr.f32.mxu0 0.0
        %937 = vmatmul.mubr.f32.gmra.mxu0 %v776
        %v938 = vpop.f32.mrf.mxu0
        %v939 = vadd.f32 %v841, %v938
        %v940 = vpop.f32.mrf.mxu0
        %v941 = vadd.f32 %v845, %v940
        %942 = vmatprep.mubr.f32.mxu0 0.0
        %943 = vmatmul.mubr.f32.gmra.mxu0 %v777
        %v944 = vpop.f32.mrf.mxu0
        %v945 = vadd.f32 %v841, %v944
        %v946 = vpop.f32.mrf.mxu0
        %v947 = vadd.f32 %v845, %v946
        %948 = vmatprep.mubr.f32.mxu0 0.0
        %949 = vmatmul.mubr.f32.gmra.mxu0 %v778
        %v950 = vpop.f32.mrf.mxu0
        %v951 = vadd.f32 %v841, %v950
        %v952 = vpop.f32.mrf.mxu0
        %v953 = vadd.f32 %v845, %v952
        %954 = vmatprep.mubr.f32.mxu0 0.0
        %955 = vmatmul.mubr.f32.gmra.mxu0 %v779
        %v956 = vpop.f32.mrf.mxu0
        %v957 = vadd.f32 %v841, %v956
        %v958 = vpop.f32.mrf.mxu0
        %v959 = vadd.f32 %v845, %v958
        %960 = vmatprep.mubr.f32.mxu0 0.0
        %961 = vmatmul.mubr.f32.gmra.mxu0 %v780
        %v962 = vpop.f32.mrf.mxu0
        %v963 = vadd.f32 %v841, %v962
        %v964 = vpop.f32.mrf.mxu0
        %v965 = vadd.f32 %v845, %v964
        %966 = vmatprep.mubr.f32.mxu0 0.0
        %967 = vmatmul.mubr.f32.gmra.mxu0 %v781
        %v968 = vpop.f32.mrf.mxu0
        %v969 = vadd.f32 %v841, %v968
        %v970 = vpop.f32.mrf.mxu0
        %v971 = vadd.f32 %v845, %v970
        %972 = vmatprep.mubr.f32.mxu0 0.0
        %973 = vmatmul.mubr.f32.gmra.mxu0 %v782
        %v974 = vpop.f32.mrf.mxu0
        %v975 = vadd.f32 %v841, %v974
        %v976 = vpop.f32.mrf.mxu0
        %v977 = vadd.f32 %v845, %v976
        %978 = vmatprep.mubr.f32.mxu0 0.0
        %979 = vmatmul.mubr.f32.gmra.mxu0 %v783
        %v980 = vpop.f32.mrf.mxu0
        %v981 = vadd.f32 %v841, %v980
        %v982 = vpop.f32.mrf.mxu0
        %v983 = vadd.f32 %v845, %v982
        %984 = vmatprep.mubr.f32.mxu0 0.0
        %985 = vmatmul.mubr.f32.gmra.mxu0 %v784
        %v986 = vpop.f32.mrf.mxu0
        %v987 = vadd.f32 %v841, %v986
        %v988 = vpop.f32.mrf.mxu0
        %v989 = vadd.f32 %v845, %v988
        %990 = vmatprep.mubr.f32.mxu0 0.0
        %991 = vmatmul.mubr.f32.gmra.mxu0 %v785
        %v992 = vpop.f32.mrf.mxu0
        %v993 = vadd.f32 %v841, %v992
        %v994 = vpop.f32.mrf.mxu0
        %v995 = vadd.f32 %v845, %v994
        %996 = vmatprep.mubr.f32.mxu0 0.0
        %997 = vmatmul.mubr.f32.gmra.mxu0 %v786
        %v998 = vpop.f32.mrf.mxu0
        %v999 = vadd.f32 %v841, %v998
        %v1000 = vpop.f32.mrf.mxu0
        %v1001 = vadd.f32 %v845, %v1000
        %1002 = vmatprep.mubr.f32.mxu0 0.0
        %1003 = vmatmul.mubr.f32.gmra.mxu0 %v787
        %v1004 = vpop.f32.mrf.mxu0
        %v1005 = vadd.f32 %v841, %v1004
        %v1006 = vpop.f32.mrf.mxu0
        %v1007 = vadd.f32 %v845, %v1006
        %1008 = vmatprep.mubr.f32.mxu0 0.0
        %1009 = vmatmul.mubr.f32.gmra.mxu0 %v788
        %v1010 = vpop.f32.mrf.mxu0
        %v1011 = vadd.f32 %v841, %v1010
        %v1012 = vpop.f32.mrf.mxu0
        %v1013 = vadd.f32 %v845, %v1012
        %1014 = vmatprep.mubr.f32.mxu0 0.0
        %1015 = vmatmul.mubr.f32.gmra.mxu0 %v789
        %v1016 = vpop.f32.mrf.mxu0
        %v1017 = vadd.f32 %v841, %v1016
        %v1018 = vpop.f32.mrf.mxu0
        %v1019 = vadd.f32 %v845, %v1018
        %1020 = vmatprep.mubr.f32.mxu0 0.0
        %1021 = vmatmul.mubr.f32.gmra.mxu0 %v790
        %v1022 = vpop.f32.mrf.mxu0
        %v1023 = vadd.f32 %v841, %v1022
        %v1024 = vpop.f32.mrf.mxu0
        %v1025 = vadd.f32 %v845, %v1024
        %1026 = vmatprep.mubr.f32.mxu0 0.0
        %1027 = vmatmul.mubr.f32.gmra.mxu0 %v791
        %v1028 = vpop.f32.mrf.mxu0
        %v1029 = vadd.f32 %v841, %v1028
        %v1030 = vpop.f32.mrf.mxu0
        %v1031 = vadd.f32 %v845, %v1030
        %1032 = vmatprep.mubr.f32.mxu0 0.0
        %1033 = vmatmul.mubr.f32.gmra.mxu0 %v792
        %v1034 = vpop.f32.mrf.mxu0
        %v1035 = vadd.f32 %v841, %v1034
        %v1036 = vpop.f32.mrf.mxu0
        %v1037 = vadd.f32 %v845, %v1036
        %1038 = vmatprep.mubr.f32.mxu0 0.0
        %1039 = vmatmul.mubr.f32.gmra.mxu0 %v793
        %v1040 = vpop.f32.mrf.mxu0
        %v1041 = vadd.f32 %v841, %v1040
        %v1042 = vpop.f32.mrf.mxu0
        %v1043 = vadd.f32 %v845, %v1042
        %1044 = vmatprep.mubr.f32.mxu0 0.0
        %1045 = vmatmul.mubr.f32.gmra.mxu0 %v794
        %v1046 = vpop.f32.mrf.mxu0
        %v1047 = vadd.f32 %v841, %v1046
        %v1048 = vpop.f32.mrf.mxu0
        %v1049 = vadd.f32 %v845, %v1048
        %1050 = vmatprep.mubr.f32.mxu0 0.0
        %1051 = vmatmul.mubr.f32.gmra.mxu0 %v795
        %v1052 = vpop.f32.mrf.mxu0
        %v1053 = vadd.f32 %v841, %v1052
        %v1054 = vpop.f32.mrf.mxu0
        %v1055 = vadd.f32 %v845, %v1054
        %1056 = vmatprep.mubr.f32.mxu0 0.0
        %1057 = vmatmul.mubr.f32.gmra.mxu0 %v796
        %v1058 = vpop.f32.mrf.mxu0
        %v1059 = vadd.f32 %v841, %v1058
        %v1060 = vpop.f32.mrf.mxu0
        %v1061 = vadd.f32 %v845, %v1060
        %1062 = vmatprep.mubr.f32.mxu0 0.0
        %1063 = vmatmul.mubr.f32.gmra.mxu0 %v797
        %v1064 = vpop.f32.mrf.mxu0
        %v1065 = vadd.f32 %v841, %v1064
        %v1066 = vpop.f32.mrf.mxu0
        %v1067 = vadd.f32 %v845, %v1066
        %1068 = vmatprep.mubr.f32.mxu0 0.0
        %1069 = vmatmul.mubr.f32.gmra.mxu0 %v798
        %v1070 = vpop.f32.mrf.mxu0
        %v1071 = vadd.f32 %v841, %v1070
        %v1072 = vpop.f32.mrf.mxu0
        %v1073 = vadd.f32 %v845, %v1072
        %1074 = vmatprep.mubr.f32.mxu0 0.0
        %1075 = vmatmul.mubr.f32.gmra.mxu0 %v799
        %v1076 = vpop.f32.mrf.mxu0
        %v1077 = vadd.f32 %v841, %v1076
        %v1078 = vpop.f32.mrf.mxu0
        %v1079 = vadd.f32 %v845, %v1078
        %1080 = vmatprep.mubr.f32.mxu0 0.0
        %1081 = vmatmul.mubr.f32.gmra.mxu0 %v800
        %v1082 = vpop.f32.mrf.mxu0
        %v1083 = vadd.f32 %v841, %v1082
        %v1084 = vpop.f32.mrf.mxu0
        %v1085 = vadd.f32 %v845, %v1084
        %1086 = vmatprep.mubr.f32.mxu0 0.0
        %1087 = vmatmul.mubr.f32.gmra.mxu0 %v801
        %v1088 = vpop.f32.mrf.mxu0
        %v1089 = vadd.f32 %v841, %v1088
        %v1090 = vpop.f32.mrf.mxu0
        %v1091 = vadd.f32 %v845, %v1090
        %1092 = vmatprep.mubr.f32.mxu0 0.0
        %1093 = vmatmul.mubr.f32.gmra.mxu0 %v802
        %v1094 = vpop.f32.mrf.mxu0
        %v1095 = vadd.f32 %v841, %v1094
        %v1096 = vpop.f32.mrf.mxu0
        %v1097 = vadd.f32 %v845, %v1096
        %1098 = vmatprep.mubr.f32.mxu0 0.0
        %1099 = vmatmul.mubr.f32.gmra.mxu0 %v803
        %v1100 = vpop.f32.mrf.mxu0
        %v1101 = vadd.f32 %v841, %v1100
        %v1102 = vpop.f32.mrf.mxu0
        %v1103 = vadd.f32 %v845, %v1102
        %1104 = vdwg.mxu0
        %v1105 = vmul.f32 %v915, 0.5
        %v1106 = vmul.f32 %v917, 0.5
        %v1107 = vmul.f32 %v921, 0.5
        %v1108 = vmul.f32 %v923, 0.5
        %v1109 = vmul.f32 %v927, 0.5
        %v1110 = vmul.f32 %v929, 0.5
        %v1111 = vmul.f32 %v933, 0.5
        %v1112 = vmul.f32 %v935, 0.5
        %v1113 = vmul.f32 %v939, 0.5
        %v1114 = vmul.f32 %v941, 0.5
        %v1115 = vmul.f32 %v945, 0.5
        %v1116 = vmul.f32 %v947, 0.5
        %v1117 = vmul.f32 %v951, 0.5
        %v1118 = vmul.f32 %v953, 0.5
        %v1119 = vmul.f32 %v957, 0.5
        %v1120 = vmul.f32 %v959, 0.5
        %v1121 = vmul.f32 %v963, 0.5
        %v1122 = vmul.f32 %v965, 0.5
        %v1123 = vmul.f32 %v969, 0.5
        %v1124 = vmul.f32 %v971, 0.5
        %v1125 = vmul.f32 %v975, 0.5
        %v1126 = vmul.f32 %v977, 0.5
        %v1127 = vmul.f32 %v981, 0.5
        %v1128 = vmul.f32 %v983, 0.5
        %v1129 = vmul.f32 %v987, 0.5
        %v1130 = vmul.f32 %v989, 0.5
        %v1131 = vmul.f32 %v993, 0.5
        %v1132 = vmul.f32 %v995, 0.5
        %v1133 = vmul.f32 %v999, 0.5
        %v1134 = vmul.f32 %v1001, 0.5
        %v1135 = vmul.f32 %v1005, 0.5
        %v1136 = vmul.f32 %v1007, 0.5
        %v1137 = vmul.f32 %v1011, 0.5
        %v1138 = vmul.f32 %v1013, 0.5
        %v1139 = vmul.f32 %v1017, 0.5
        %v1140 = vmul.f32 %v1019, 0.5
        %v1141 = vmul.f32 %v1023, 0.5
        %v1142 = vmul.f32 %v1025, 0.5
        %v1143 = vmul.f32 %v1029, 0.5
        %v1144 = vmul.f32 %v1031, 0.5
        %v1145 = vmul.f32 %v1035, 0.5
        %v1146 = vmul.f32 %v1037, 0.5
        %v1147 = vmul.f32 %v1041, 0.5
        %v1148 = vmul.f32 %v1043, 0.5
        %v1149 = vmul.f32 %v1047, 0.5
        %v1150 = vmul.f32 %v1049, 0.5
        %v1151 = vmul.f32 %v1053, 0.5
        %v1152 = vmul.f32 %v1055, 0.5
        %v1153 = vmul.f32 %v1059, 0.5
        %v1154 = vmul.f32 %v1061, 0.5
        %v1155 = vmul.f32 %v1065, 0.5
        %v1156 = vmul.f32 %v1067, 0.5
        %v1157 = vmul.f32 %v1071, 0.5
        %v1158 = vmul.f32 %v1073, 0.5
        %v1159 = vmul.f32 %v1077, 0.5
        %v1160 = vmul.f32 %v1079, 0.5
        %v1161 = vmul.f32 %v1083, 0.5
        %v1162 = vmul.f32 %v1085, 0.5
        %v1163 = vmul.f32 %v1089, 0.5
        %v1164 = vmul.f32 %v1091, 0.5
        %v1165 = vmul.f32 %v1095, 0.5
        %v1166 = vmul.f32 %v1097, 0.5
        %v1167 = vmul.f32 %v1101, 0.5
        %v1168 = vmul.f32 %v1103, 0.5
        %v1169 = vmul.f32 %v915, 0.70710677
        %v1170 = vmul.f32 %v917, 0.70710677
        %v1171 = vmul.f32 %v921, 0.70710677
        %v1172 = vmul.f32 %v923, 0.70710677
        %v1173 = vmul.f32 %v927, 0.70710677
        %v1174 = vmul.f32 %v929, 0.70710677
        %v1175 = vmul.f32 %v933, 0.70710677
        %v1176 = vmul.f32 %v935, 0.70710677
        %v1177 = vmul.f32 %v939, 0.70710677
        %v1178 = vmul.f32 %v941, 0.70710677
        %v1179 = vmul.f32 %v945, 0.70710677
        %v1180 = vmul.f32 %v947, 0.70710677
        %v1181 = vmul.f32 %v951, 0.70710677
        %v1182 = vmul.f32 %v953, 0.70710677
        %v1183 = vmul.f32 %v957, 0.70710677
        %v1184 = vmul.f32 %v959, 0.70710677
        %v1185 = vmul.f32 %v963, 0.70710677
        %v1186 = vmul.f32 %v965, 0.70710677
        %v1187 = vmul.f32 %v969, 0.70710677
        %v1188 = vmul.f32 %v971, 0.70710677
        %v1189 = vmul.f32 %v975, 0.70710677
        %v1190 = vmul.f32 %v977, 0.70710677
        %v1191 = vmul.f32 %v981, 0.70710677
        %v1192 = vmul.f32 %v983, 0.70710677
        %v1193 = vmul.f32 %v987, 0.70710677
        %v1194 = vmul.f32 %v989, 0.70710677
        %v1195 = vmul.f32 %v993, 0.70710677
        %v1196 = vmul.f32 %v995, 0.70710677
        %v1197 = vmul.f32 %v999, 0.70710677
        %v1198 = vmul.f32 %v1001, 0.70710677
        %v1199 = vmul.f32 %v1005, 0.70710677
        %v1200 = vmul.f32 %v1007, 0.70710677
        %v1201 = vmul.f32 %v1011, 0.70710677
        %v1202 = vmul.f32 %v1013, 0.70710677
        %v1203 = vmul.f32 %v1017, 0.70710677
        %v1204 = vmul.f32 %v1019, 0.70710677
        %v1205 = vmul.f32 %v1023, 0.70710677
        %v1206 = vmul.f32 %v1025, 0.70710677
        %v1207 = vmul.f32 %v1029, 0.70710677
        %v1208 = vmul.f32 %v1031, 0.70710677
        %v1209 = vmul.f32 %v1035, 0.70710677
        %v1210 = vmul.f32 %v1037, 0.70710677
        %v1211 = vmul.f32 %v1041, 0.70710677
        %v1212 = vmul.f32 %v1043, 0.70710677
        %v1213 = vmul.f32 %v1047, 0.70710677
        %v1214 = vmul.f32 %v1049, 0.70710677
        %v1215 = vmul.f32 %v1053, 0.70710677
        %v1216 = vmul.f32 %v1055, 0.70710677
        %v1217 = vmul.f32 %v1059, 0.70710677
        %v1218 = vmul.f32 %v1061, 0.70710677
        %v1219 = vmul.f32 %v1065, 0.70710677
        %v1220 = vmul.f32 %v1067, 0.70710677
        %v1221 = vmul.f32 %v1071, 0.70710677
        %v1222 = vmul.f32 %v1073, 0.70710677
        %v1223 = vmul.f32 %v1077, 0.70710677
        %v1224 = vmul.f32 %v1079, 0.70710677
        %v1225 = vmul.f32 %v1083, 0.70710677
        %v1226 = vmul.f32 %v1085, 0.70710677
        %v1227 = vmul.f32 %v1089, 0.70710677
        %v1228 = vmul.f32 %v1091, 0.70710677
        %v1229 = vmul.f32 %v1095, 0.70710677
        %v1230 = vmul.f32 %v1097, 0.70710677
        %v1231 = vmul.f32 %v1101, 0.70710677
        %v1232 = vmul.f32 %v1103, 0.70710677
        %v1233 = verf.f32.pop %v1169
        %v1234 = verf.f32.pop %v1170
        %v1235 = verf.f32.pop %v1171
        %v1236 = verf.f32.pop %v1172
        %v1237 = verf.f32.pop %v1173
        %v1238 = verf.f32.pop %v1174
        %v1239 = verf.f32.pop %v1175
        %v1240 = verf.f32.pop %v1176
        %v1241 = verf.f32.pop %v1177
        %v1242 = verf.f32.pop %v1178
        %v1243 = verf.f32.pop %v1179
        %v1244 = verf.f32.pop %v1180
        %v1245 = verf.f32.pop %v1181
        %v1246 = verf.f32.pop %v1182
        %v1247 = verf.f32.pop %v1183
        %v1248 = verf.f32.pop %v1184
        %v1249 = verf.f32.pop %v1185
        %v1250 = verf.f32.pop %v1186
        %v1251 = verf.f32.pop %v1187
        %v1252 = verf.f32.pop %v1188
        %v1253 = verf.f32.pop %v1189
        %v1254 = verf.f32.pop %v1190
        %v1255 = verf.f32.pop %v1191
        %v1256 = verf.f32.pop %v1192
        %v1257 = verf.f32.pop %v1193
        %v1258 = verf.f32.pop %v1194
        %v1259 = verf.f32.pop %v1195
        %v1260 = verf.f32.pop %v1196
        %v1261 = verf.f32.pop %v1197
        %v1262 = verf.f32.pop %v1198
        %v1263 = verf.f32.pop %v1199
        %v1264 = verf.f32.pop %v1200
        %v1265 = verf.f32.pop %v1201
        %v1266 = verf.f32.pop %v1202
        %v1267 = verf.f32.pop %v1203
        %v1268 = verf.f32.pop %v1204
        %v1269 = verf.f32.pop %v1205
        %v1270 = verf.f32.pop %v1206
        %v1271 = verf.f32.pop %v1207
        %v1272 = verf.f32.pop %v1208
        %v1273 = verf.f32.pop %v1209
        %v1274 = verf.f32.pop %v1210
        %v1275 = verf.f32.pop %v1211
        %v1276 = verf.f32.pop %v1212
        %v1277 = verf.f32.pop %v1213
        %v1278 = verf.f32.pop %v1214
        %v1279 = verf.f32.pop %v1215
        %v1280 = verf.f32.pop %v1216
        %v1281 = verf.f32.pop %v1217
        %v1282 = verf.f32.pop %v1218
        %v1283 = verf.f32.pop %v1219
        %v1284 = verf.f32.pop %v1220
        %v1285 = verf.f32.pop %v1221
        %v1286 = verf.f32.pop %v1222
        %v1287 = verf.f32.pop %v1223
        %v1288 = verf.f32.pop %v1224
        %v1289 = verf.f32.pop %v1225
        %v1290 = verf.f32.pop %v1226
        %v1291 = verf.f32.pop %v1227
        %v1292 = verf.f32.pop %v1228
        %v1293 = verf.f32.pop %v1229
        %v1294 = verf.f32.pop %v1230
        %v1295 = verf.f32.pop %v1231
        %v1296 = verf.f32.pop %v1232
        %v1297 = vadd.f32 %v1233, 1.0
        %v1298 = vadd.f32 %v1234, 1.0
        %v1299 = vadd.f32 %v1235, 1.0
        %v1300 = vadd.f32 %v1236, 1.0
        %v1301 = vadd.f32 %v1237, 1.0
        %v1302 = vadd.f32 %v1238, 1.0
        %v1303 = vadd.f32 %v1239, 1.0
        %v1304 = vadd.f32 %v1240, 1.0
        %v1305 = vadd.f32 %v1241, 1.0
        %v1306 = vadd.f32 %v1242, 1.0
        %v1307 = vadd.f32 %v1243, 1.0
        %v1308 = vadd.f32 %v1244, 1.0
        %v1309 = vadd.f32 %v1245, 1.0
        %v1310 = vadd.f32 %v1246, 1.0
        %v1311 = vadd.f32 %v1247, 1.0
        %v1312 = vadd.f32 %v1248, 1.0
        %v1313 = vadd.f32 %v1249, 1.0
        %v1314 = vadd.f32 %v1250, 1.0
        %v1315 = vadd.f32 %v1251, 1.0
        %v1316 = vadd.f32 %v1252, 1.0
        %v1317 = vadd.f32 %v1253, 1.0
        %v1318 = vadd.f32 %v1254, 1.0
        %v1319 = vadd.f32 %v1255, 1.0
        %v1320 = vadd.f32 %v1256, 1.0
        %v1321 = vadd.f32 %v1257, 1.0
        %v1322 = vadd.f32 %v1258, 1.0
        %v1323 = vadd.f32 %v1259, 1.0
        %v1324 = vadd.f32 %v1260, 1.0
        %v1325 = vadd.f32 %v1261, 1.0
        %v1326 = vadd.f32 %v1262, 1.0
        %v1327 = vadd.f32 %v1263, 1.0
        %v1328 = vadd.f32 %v1264, 1.0
        %v1329 = vadd.f32 %v1265, 1.0
        %v1330 = vadd.f32 %v1266, 1.0
        %v1331 = vadd.f32 %v1267, 1.0
        %v1332 = vadd.f32 %v1268, 1.0
        %v1333 = vadd.f32 %v1269, 1.0
        %v1334 = vadd.f32 %v1270, 1.0
        %v1335 = vadd.f32 %v1271, 1.0
        %v1336 = vadd.f32 %v1272, 1.0
        %v1337 = vadd.f32 %v1273, 1.0
        %v1338 = vadd.f32 %v1274, 1.0
        %v1339 = vadd.f32 %v1275, 1.0
        %v1340 = vadd.f32 %v1276, 1.0
        %v1341 = vadd.f32 %v1277, 1.0
        %v1342 = vadd.f32 %v1278, 1.0
        %v1343 = vadd.f32 %v1279, 1.0
        %v1344 = vadd.f32 %v1280, 1.0
        %v1345 = vadd.f32 %v1281, 1.0
        %v1346 = vadd.f32 %v1282, 1.0
        %v1347 = vadd.f32 %v1283, 1.0
        %v1348 = vadd.f32 %v1284, 1.0
        %v1349 = vadd.f32 %v1285, 1.0
        %v1350 = vadd.f32 %v1286, 1.0
        %v1351 = vadd.f32 %v1287, 1.0
        %v1352 = vadd.f32 %v1288, 1.0
        %v1353 = vadd.f32 %v1289, 1.0
        %v1354 = vadd.f32 %v1290, 1.0
        %v1355 = vadd.f32 %v1291, 1.0
        %v1356 = vadd.f32 %v1292, 1.0
        %v1357 = vadd.f32 %v1293, 1.0
        %v1358 = vadd.f32 %v1294, 1.0
        %v1359 = vadd.f32 %v1295, 1.0
        %v1360 = vadd.f32 %v1296, 1.0
        %v1361 = vmul.f32 %v1105, %v1297
        %v1362 = vmul.f32 %v1106, %v1298
        %v1363 = vmul.f32 %v1107, %v1299
        %v1364 = vmul.f32 %v1108, %v1300
        %v1365 = vmul.f32 %v1109, %v1301
        %v1366 = vmul.f32 %v1110, %v1302
        %v1367 = vmul.f32 %v1111, %v1303
        %v1368 = vmul.f32 %v1112, %v1304
        %v1369 = vmul.f32 %v1113, %v1305
        %v1370 = vmul.f32 %v1114, %v1306
        %v1371 = vmul.f32 %v1115, %v1307
        %v1372 = vmul.f32 %v1116, %v1308
        %v1373 = vmul.f32 %v1117, %v1309
        %v1374 = vmul.f32 %v1118, %v1310
        %v1375 = vmul.f32 %v1119, %v1311
        %v1376 = vmul.f32 %v1120, %v1312
        %v1377 = vmul.f32 %v1121, %v1313
        %v1378 = vmul.f32 %v1122, %v1314
        %v1379 = vmul.f32 %v1123, %v1315
        %v1380 = vmul.f32 %v1124, %v1316
        %v1381 = vmul.f32 %v1125, %v1317
        %v1382 = vmul.f32 %v1126, %v1318
        %v1383 = vmul.f32 %v1127, %v1319
        %v1384 = vmul.f32 %v1128, %v1320
        %v1385 = vmul.f32 %v1129, %v1321
        %v1386 = vmul.f32 %v1130, %v1322
        %v1387 = vmul.f32 %v1131, %v1323
        %v1388 = vmul.f32 %v1132, %v1324
        %v1389 = vmul.f32 %v1133, %v1325
        %v1390 = vmul.f32 %v1134, %v1326
        %v1391 = vmul.f32 %v1135, %v1327
        %v1392 = vmul.f32 %v1136, %v1328
        %v1393 = vmul.f32 %v1137, %v1329
        %v1394 = vmul.f32 %v1138, %v1330
        %v1395 = vmul.f32 %v1139, %v1331
        %v1396 = vmul.f32 %v1140, %v1332
        %v1397 = vmul.f32 %v1141, %v1333
        %v1398 = vmul.f32 %v1142, %v1334
        %v1399 = vmul.f32 %v1143, %v1335
        %v1400 = vmul.f32 %v1144, %v1336
        %v1401 = vmul.f32 %v1145, %v1337
        %v1402 = vmul.f32 %v1146, %v1338
        %v1403 = vmul.f32 %v1147, %v1339
        %v1404 = vmul.f32 %v1148, %v1340
        %v1405 = vmul.f32 %v1149, %v1341
        %v1406 = vmul.f32 %v1150, %v1342
        %v1407 = vmul.f32 %v1151, %v1343
        %v1408 = vmul.f32 %v1152, %v1344
        %v1409 = vmul.f32 %v1153, %v1345
        %v1410 = vmul.f32 %v1154, %v1346
        %v1411 = vmul.f32 %v1155, %v1347
        %v1412 = vmul.f32 %v1156, %v1348
        %v1413 = vmul.f32 %v1157, %v1349
        %v1414 = vmul.f32 %v1158, %v1350
        %v1415 = vmul.f32 %v1159, %v1351
        %v1416 = vmul.f32 %v1160, %v1352
        %v1417 = vmul.f32 %v1161, %v1353
        %v1418 = vmul.f32 %v1162, %v1354
        %v1419 = vmul.f32 %v1163, %v1355
        %v1420 = vmul.f32 %v1164, %v1356
        %v1421 = vmul.f32 %v1165, %v1357
        %v1422 = vmul.f32 %v1166, %v1358
        %v1423 = vmul.f32 %v1167, %v1359
        %v1424 = vmul.f32 %v1168, %v1360
        %v1425 = vld [vmem:[#allocation8] sm:$0xff]
        %v1426 = vld [vmem:[#allocation8 + $0x8] sm:$0xff]
        %v1427 = vld [vmem:[#allocation8 + $0x10] sm:$0xff]
        %v1428 = vld [vmem:[#allocation8 + $0x18] sm:$0xff]
        %v1429 = vld [vmem:[#allocation8 + $0x20] sm:$0xff]
        %v1430 = vld [vmem:[#allocation8 + $0x28] sm:$0xff]
        %v1431 = vld [vmem:[#allocation8 + $0x30] sm:$0xff]
        %v1432 = vld [vmem:[#allocation8 + $0x38] sm:$0xff]
        %v1433 = vld [vmem:[#allocation8 + $0x40] sm:$0xff]
        %v1434 = vld [vmem:[#allocation8 + $0x48] sm:$0xff]
        %v1435 = vld [vmem:[#allocation8 + $0x50] sm:$0xff]
        %v1436 = vld [vmem:[#allocation8 + $0x58] sm:$0xff]
        %v1437 = vld [vmem:[#allocation8 + $0x60] sm:$0xff]
        %v1438 = vld [vmem:[#allocation8 + $0x68] sm:$0xff]
        %v1439 = vld [vmem:[#allocation8 + $0x70] sm:$0xff]
        %v1440 = vld [vmem:[#allocation8 + $0x78] sm:$0xff]
        %v1441 = vld [vmem:[#allocation8 + $0x80] sm:$0xff]
        %v1442 = vld [vmem:[#allocation8 + $0x88] sm:$0xff]
        %v1443 = vld [vmem:[#allocation8 + $0x90] sm:$0xff]
        %v1444 = vld [vmem:[#allocation8 + $0x98] sm:$0xff]
        %v1445 = vld [vmem:[#allocation8 + $0xa0] sm:$0xff]
        %v1446 = vld [vmem:[#allocation8 + $0xa8] sm:$0xff]
        %v1447 = vld [vmem:[#allocation8 + $0xb0] sm:$0xff]
        %v1448 = vld [vmem:[#allocation8 + $0xb8] sm:$0xff]
        %v1449 = vld [vmem:[#allocation8 + $0xc0] sm:$0xff]
        %v1450 = vld [vmem:[#allocation8 + $0xc8] sm:$0xff]
        %v1451 = vld [vmem:[#allocation8 + $0xd0] sm:$0xff]
        %v1452 = vld [vmem:[#allocation8 + $0xd8] sm:$0xff]
        %v1453 = vld [vmem:[#allocation8 + $0xe0] sm:$0xff]
        %v1454 = vld [vmem:[#allocation8 + $0xe8] sm:$0xff]
        %v1455 = vld [vmem:[#allocation8 + $0xf0] sm:$0xff]
        %v1456 = vld [vmem:[#allocation8 + $0xf8] sm:$0xff]
        %v1457 = vld [vmem:[%s6] sm:$0x1]
        %v1459 = vlaneseq
        %v1460 = vshrl.u32 %v1459, 7
        %v1461 = vsub.s32 0, %v1460
        %v1462 = vrot.slane %v1457, %v1461
        %1464 = vmatprep.subr.mxu0 0.0
        %1465 = vmatpush1.msra.mxu0 %v1440
        %1466 = vmatprep.subr.mxu0 0.0
        %1467 = vmatpush1.msra.mxu0 %v1439
        %1468 = vmatprep.subr.mxu0 0.0
        %1469 = vmatpush1.msra.mxu0 %v1438
        %1470 = vmatprep.subr.mxu0 0.0
        %1471 = vmatpush1.msra.mxu0 %v1437
        %1472 = vmatprep.subr.mxu0 0.0
        %1473 = vmatpush1.msra.mxu0 %v1436
        %1474 = vmatprep.subr.mxu0 0.0
        %1475 = vmatpush1.msra.mxu0 %v1435
        %1476 = vmatprep.subr.mxu0 0.0
        %1477 = vmatpush1.msra.mxu0 %v1434
        %1478 = vmatprep.subr.mxu0 0.0
        %1479 = vmatpush1.msra.mxu0 %v1433
        %1480 = vmatprep.subr.mxu0 0.0
        %1481 = vmatpush1.msra.mxu0 %v1432
        %1482 = vmatprep.subr.mxu0 0.0
        %1483 = vmatpush1.msra.mxu0 %v1431
        %1484 = vmatprep.subr.mxu0 0.0
        %1485 = vmatpush1.msra.mxu0 %v1430
        %1486 = vmatprep.subr.mxu0 0.0
        %1487 = vmatpush1.msra.mxu0 %v1429
        %1488 = vmatprep.subr.mxu0 0.0
        %1489 = vmatpush1.msra.mxu0 %v1428
        %1490 = vmatprep.subr.mxu0 0.0
        %1491 = vmatpush1.msra.mxu0 %v1427
        %1492 = vmatprep.subr.mxu0 0.0
        %1493 = vmatpush1.msra.mxu0 %v1426
        %1494 = vmatprep.subr.mxu0 0.0
        %1495 = vmatpush1.msra.mxu0 %v1425
        %1496 = vmatprep.subr.mxu0 0.0
        %1497 = vmatpush2.msra.mxu0 %v1456
        %1498 = vmatprep.subr.mxu0 0.0
        %1499 = vmatpush2.msra.mxu0 %v1455
        %1500 = vmatprep.subr.mxu0 0.0
        %1501 = vmatpush2.msra.mxu0 %v1454
        %1502 = vmatprep.subr.mxu0 0.0
        %1503 = vmatpush2.msra.mxu0 %v1453
        %1504 = vmatprep.subr.mxu0 0.0
        %1505 = vmatpush2.msra.mxu0 %v1452
        %1506 = vmatprep.subr.mxu0 0.0
        %1507 = vmatpush2.msra.mxu0 %v1451
        %1508 = vmatprep.subr.mxu0 0.0
        %1509 = vmatpush2.msra.mxu0 %v1450
        %1510 = vmatprep.subr.mxu0 0.0
        %1511 = vmatpush2.msra.mxu0 %v1449
        %1512 = vmatprep.subr.mxu0 0.0
        %1513 = vmatpush2.msra.mxu0 %v1448
        %1514 = vmatprep.subr.mxu0 0.0
        %1515 = vmatpush2.msra.mxu0 %v1447
        %1516 = vmatprep.subr.mxu0 0.0
        %1517 = vmatpush2.msra.mxu0 %v1446
        %1518 = vmatprep.subr.mxu0 0.0
        %1519 = vmatpush2.msra.mxu0 %v1445
        %1520 = vmatprep.subr.mxu0 0.0
        %1521 = vmatpush2.msra.mxu0 %v1444
        %1522 = vmatprep.subr.mxu0 0.0
        %1523 = vmatpush2.msra.mxu0 %v1443
        %1524 = vmatprep.subr.mxu0 0.0
        %1525 = vmatpush2.msra.mxu0 %v1442
        %1526 = vmatprep.subr.mxu0 0.0
        %1527 = vmatpush2.msra.mxu0 %v1441
        %1528 = vmatprep.mubr.f32.mxu0 %v1362
        %1529 = vmatmul.mubr.f32.gmra.mxu0 %v1361
        %v1530 = vpop.f32.mrf.mxu0
        %v1531 = vadd.f32 %v1462, %v1530
        %v1532 = vpop.f32.mrf.mxu0
        %1533 = vmatprep.mubr.f32.mxu0 %v1364
        %1534 = vmatmul.mubr.f32.gmra.mxu0 %v1363
        %v1535 = vpop.f32.mrf.mxu0
        %v1536 = vadd.f32 %v1462, %v1535
        %v1537 = vpop.f32.mrf.mxu0
        %1538 = vmatprep.mubr.f32.mxu0 %v1366
        %1539 = vmatmul.mubr.f32.gmra.mxu0 %v1365
        %v1540 = vpop.f32.mrf.mxu0
        %v1541 = vadd.f32 %v1462, %v1540
        %v1542 = vpop.f32.mrf.mxu0
        %1543 = vmatprep.mubr.f32.mxu0 %v1368
        %1544 = vmatmul.mubr.f32.gmra.mxu0 %v1367
        %v1545 = vpop.f32.mrf.mxu0
        %v1546 = vadd.f32 %v1462, %v1545
        %v1547 = vpop.f32.mrf.mxu0
        %1548 = vmatprep.mubr.f32.mxu0 %v1370
        %1549 = vmatmul.mubr.f32.gmra.mxu0 %v1369
        %v1550 = vpop.f32.mrf.mxu0
        %v1551 = vadd.f32 %v1462, %v1550
        %v1552 = vpop.f32.mrf.mxu0
        %1553 = vmatprep.mubr.f32.mxu0 %v1372
        %1554 = vmatmul.mubr.f32.gmra.mxu0 %v1371
        %v1555 = vpop.f32.mrf.mxu0
        %v1556 = vadd.f32 %v1462, %v1555
        %v1557 = vpop.f32.mrf.mxu0
        %1558 = vmatprep.mubr.f32.mxu0 %v1374
        %1559 = vmatmul.mubr.f32.gmra.mxu0 %v1373
        %v1560 = vpop.f32.mrf.mxu0
        %v1561 = vadd.f32 %v1462, %v1560
        %v1562 = vpop.f32.mrf.mxu0
        %1563 = vmatprep.mubr.f32.mxu0 %v1376
        %1564 = vmatmul.mubr.f32.gmra.mxu0 %v1375
        %v1565 = vpop.f32.mrf.mxu0
        %v1566 = vadd.f32 %v1462, %v1565
        %v1567 = vpop.f32.mrf.mxu0
        %1568 = vmatprep.mubr.f32.mxu0 %v1378
        %1569 = vmatmul.mubr.f32.gmra.mxu0 %v1377
        %v1570 = vpop.f32.mrf.mxu0
        %v1571 = vadd.f32 %v1462, %v1570
        %v1572 = vpop.f32.mrf.mxu0
        %1573 = vmatprep.mubr.f32.mxu0 %v1380
        %1574 = vmatmul.mubr.f32.gmra.mxu0 %v1379
        %v1575 = vpop.f32.mrf.mxu0
        %v1576 = vadd.f32 %v1462, %v1575
        %v1577 = vpop.f32.mrf.mxu0
        %1578 = vmatprep.mubr.f32.mxu0 %v1382
        %1579 = vmatmul.mubr.f32.gmra.mxu0 %v1381
        %v1580 = vpop.f32.mrf.mxu0
        %v1581 = vadd.f32 %v1462, %v1580
        %v1582 = vpop.f32.mrf.mxu0
        %1583 = vmatprep.mubr.f32.mxu0 %v1384
        %1584 = vmatmul.mubr.f32.gmra.mxu0 %v1383
        %v1585 = vpop.f32.mrf.mxu0
        %v1586 = vadd.f32 %v1462, %v1585
        %v1587 = vpop.f32.mrf.mxu0
        %1588 = vmatprep.mubr.f32.mxu0 %v1386
        %1589 = vmatmul.mubr.f32.gmra.mxu0 %v1385
        %v1590 = vpop.f32.mrf.mxu0
        %v1591 = vadd.f32 %v1462, %v1590
        %v1592 = vpop.f32.mrf.mxu0
        %1593 = vmatprep.mubr.f32.mxu0 %v1388
        %1594 = vmatmul.mubr.f32.gmra.mxu0 %v1387
        %v1595 = vpop.f32.mrf.mxu0
        %v1596 = vadd.f32 %v1462, %v1595
        %v1597 = vpop.f32.mrf.mxu0
        %1598 = vmatprep.mubr.f32.mxu0 %v1390
        %1599 = vmatmul.mubr.f32.gmra.mxu0 %v1389
        %v1600 = vpop.f32.mrf.mxu0
        %v1601 = vadd.f32 %v1462, %v1600
        %v1602 = vpop.f32.mrf.mxu0
        %1603 = vmatprep.mubr.f32.mxu0 %v1392
        %1604 = vmatmul.mubr.f32.gmra.mxu0 %v1391
        %v1605 = vpop.f32.mrf.mxu0
        %v1606 = vadd.f32 %v1462, %v1605
        %v1607 = vpop.f32.mrf.mxu0
        %1608 = vmatprep.mubr.f32.mxu0 %v1394
        %1609 = vmatmul.mubr.f32.gmra.mxu0 %v1393
        %v1610 = vpop.f32.mrf.mxu0
        %v1611 = vadd.f32 %v1462, %v1610
        %v1612 = vpop.f32.mrf.mxu0
        %1613 = vmatprep.mubr.f32.mxu0 %v1396
        %1614 = vmatmul.mubr.f32.gmra.mxu0 %v1395
        %v1615 = vpop.f32.mrf.mxu0
        %v1616 = vadd.f32 %v1462, %v1615
        %v1617 = vpop.f32.mrf.mxu0
        %1618 = vmatprep.mubr.f32.mxu0 %v1398
        %1619 = vmatmul.mubr.f32.gmra.mxu0 %v1397
        %v1620 = vpop.f32.mrf.mxu0
        %v1621 = vadd.f32 %v1462, %v1620
        %v1622 = vpop.f32.mrf.mxu0
        %1623 = vmatprep.mubr.f32.mxu0 %v1400
        %1624 = vmatmul.mubr.f32.gmra.mxu0 %v1399
        %v1625 = vpop.f32.mrf.mxu0
        %v1626 = vadd.f32 %v1462, %v1625
        %v1627 = vpop.f32.mrf.mxu0
        %1628 = vmatprep.mubr.f32.mxu0 %v1402
        %1629 = vmatmul.mubr.f32.gmra.mxu0 %v1401
        %v1630 = vpop.f32.mrf.mxu0
        %v1631 = vadd.f32 %v1462, %v1630
        %v1632 = vpop.f32.mrf.mxu0
        %1633 = vmatprep.mubr.f32.mxu0 %v1404
        %1634 = vmatmul.mubr.f32.gmra.mxu0 %v1403
        %v1635 = vpop.f32.mrf.mxu0
        %v1636 = vadd.f32 %v1462, %v1635
        %v1637 = vpop.f32.mrf.mxu0
        %1638 = vmatprep.mubr.f32.mxu0 %v1406
        %1639 = vmatmul.mubr.f32.gmra.mxu0 %v1405
        %v1640 = vpop.f32.mrf.mxu0
        %v1641 = vadd.f32 %v1462, %v1640
        %v1642 = vpop.f32.mrf.mxu0
        %1643 = vmatprep.mubr.f32.mxu0 %v1408
        %1644 = vmatmul.mubr.f32.gmra.mxu0 %v1407
        %v1645 = vpop.f32.mrf.mxu0
        %v1646 = vadd.f32 %v1462, %v1645
        %v1647 = vpop.f32.mrf.mxu0
        %1648 = vmatprep.mubr.f32.mxu0 %v1410
        %1649 = vmatmul.mubr.f32.gmra.mxu0 %v1409
        %v1650 = vpop.f32.mrf.mxu0
        %v1651 = vadd.f32 %v1462, %v1650
        %v1652 = vpop.f32.mrf.mxu0
        %1653 = vmatprep.mubr.f32.mxu0 %v1412
        %1654 = vmatmul.mubr.f32.gmra.mxu0 %v1411
        %v1655 = vpop.f32.mrf.mxu0
        %v1656 = vadd.f32 %v1462, %v1655
        %v1657 = vpop.f32.mrf.mxu0
        %1658 = vmatprep.mubr.f32.mxu0 %v1414
        %1659 = vmatmul.mubr.f32.gmra.mxu0 %v1413
        %v1660 = vpop.f32.mrf.mxu0
        %v1661 = vadd.f32 %v1462, %v1660
        %v1662 = vpop.f32.mrf.mxu0
        %1663 = vmatprep.mubr.f32.mxu0 %v1416
        %1664 = vmatmul.mubr.f32.gmra.mxu0 %v1415
        %v1665 = vpop.f32.mrf.mxu0
        %v1666 = vadd.f32 %v1462, %v1665
        %v1667 = vpop.f32.mrf.mxu0
        %1668 = vmatprep.mubr.f32.mxu0 %v1418
        %1669 = vmatmul.mubr.f32.gmra.mxu0 %v1417
        %v1670 = vpop.f32.mrf.mxu0
        %v1671 = vadd.f32 %v1462, %v1670
        %v1672 = vpop.f32.mrf.mxu0
        %1673 = vmatprep.mubr.f32.mxu0 %v1420
        %1674 = vmatmul.mubr.f32.gmra.mxu0 %v1419
        %v1675 = vpop.f32.mrf.mxu0
        %v1676 = vadd.f32 %v1462, %v1675
        %v1677 = vpop.f32.mrf.mxu0
        %1678 = vmatprep.mubr.f32.mxu0 %v1422
        %1679 = vmatmul.mubr.f32.gmra.mxu0 %v1421
        %v1680 = vpop.f32.mrf.mxu0
        %v1681 = vadd.f32 %v1462, %v1680
        %v1682 = vpop.f32.mrf.mxu0
        %1683 = vmatprep.mubr.f32.mxu0 %v1424
        %1684 = vmatmul.mubr.f32.gmra.mxu0 %v1423
        %v1685 = vpop.f32.mrf.mxu0
        %v1686 = vadd.f32 %v1462, %v1685
        %v1687 = vpop.f32.mrf.mxu0
        %1688 = vdwg.mxu0
        %1689 = vst [vmem:[%s338] sm:$0xff] %v1531
        %1690 = vst [vmem:[%s338 + $0x8] sm:$0xff] %v1536
        %1691 = vst [vmem:[%s338 + $0x10] sm:$0xff] %v1541
        %1692 = vst [vmem:[%s338 + $0x18] sm:$0xff] %v1546
        %1693 = vst [vmem:[%s338 + $0x20] sm:$0xff] %v1551
        %1694 = vst [vmem:[%s338 + $0x28] sm:$0xff] %v1556
        %1695 = vst [vmem:[%s338 + $0x30] sm:$0xff] %v1561
        %1696 = vst [vmem:[%s338 + $0x38] sm:$0xff] %v1566
        %1697 = vst [vmem:[%s338 + $0x40] sm:$0xff] %v1571
        %1698 = vst [vmem:[%s338 + $0x48] sm:$0xff] %v1576
        %1699 = vst [vmem:[%s338 + $0x50] sm:$0xff] %v1581
        %1700 = vst [vmem:[%s338 + $0x58] sm:$0xff] %v1586
        %1701 = vst [vmem:[%s338 + $0x60] sm:$0xff] %v1591
        %1702 = vst [vmem:[%s338 + $0x68] sm:$0xff] %v1596
        %1703 = vst [vmem:[%s338 + $0x70] sm:$0xff] %v1601
        %1704 = vst [vmem:[%s338 + $0x78] sm:$0xff] %v1606
        %1705 = vst [vmem:[%s338 + $0x80] sm:$0xff] %v1611
        %1706 = vst [vmem:[%s338 + $0x88] sm:$0xff] %v1616
        %1707 = vst [vmem:[%s338 + $0x90] sm:$0xff] %v1621
        %1708 = vst [vmem:[%s338 + $0x98] sm:$0xff] %v1626
        %1709 = vst [vmem:[%s338 + $0xa0] sm:$0xff] %v1631
        %1710 = vst [vmem:[%s338 + $0xa8] sm:$0xff] %v1636
        %1711 = vst [vmem:[%s338 + $0xb0] sm:$0xff] %v1641
        %1712 = vst [vmem:[%s338 + $0xb8] sm:$0xff] %v1646
        %1713 = vst [vmem:[%s338 + $0xc0] sm:$0xff] %v1651
        %1714 = vst [vmem:[%s338 + $0xc8] sm:$0xff] %v1656
        %1715 = vst [vmem:[%s338 + $0xd0] sm:$0xff] %v1661
        %1716 = vst [vmem:[%s338 + $0xd8] sm:$0xff] %v1666
        %1717 = vst [vmem:[%s338 + $0xe0] sm:$0xff] %v1671
        %1718 = vst [vmem:[%s338 + $0xe8] sm:$0xff] %v1676
        %1719 = vst [vmem:[%s338 + $0xf0] sm:$0xff] %v1681
        %1720 = vst [vmem:[%s338 + $0xf8] sm:$0xff] %v1686
        %s1721 = sand.u32 %s186, 1
        %s1722 = scalar_lea.sflag [#allocation4], %s1721
        %s1723 = sand.u32 %s186, 1
        %s1724 = smul.addr %s1723, 256
        %s1725 = scalar_lea.vmem [#allocation10], %s1724
        // Predicated region
        $region65: #{tpu_custom_call.1} parent=47 // pred_check
          %p1726 = pneg %p196
        $region66: #{tpu_custom_call.1} parent=47 // pred_check_branch
          %1728 = sbr.rel (%p1726) target = $region68
        $region67: #{tpu_custom_call.1} parent=47 // pred_region
          %s1729 = smul.u32 32, %s26
          %s1731 = ssub.s32 4096, 4096
          %1732 = vsyncadd %s1722, %s1731
          %s1733 = smul.addr %s1729, 128
          %s1734 = scalar_lea.hbm %s7, %s1733
          %s1735 = sshll.u32 %s1725, 4
          %s1736 = int_to_ptr.vmem [resolvable:$true] %s1735
          %1741 = dma.vmem_to_hbm [thread:$0]  %s1736, 4096, %s1734, %s1722, 128, 128, 8
        $region68: #{tpu_custom_call.1} parent=47 // pred_fallthru
          _
      $region48: #{tpu_custom_call.1} parent=5 // pred_fallthru
        _
      %p1742 = scmp.le.s32.totalorder 2, %s21
      // Predicated region
      $region69: #{tpu_custom_call.1} parent=5 // pred_check
        %p1743 = pneg %p1742
      $region70: #{tpu_custom_call.1} parent=5 // pred_check_branch
        %1745 = sbr.rel (%p1743) target = $region72
      $region71: #{tpu_custom_call.1} parent=5 // pred_region
        %s1746 = ssub.s32 %s21, 2
        // Predicated region
        $region73: #{tpu_custom_call.1} parent=71 // pred_check
          %p1747 = pneg %p202
        $region74: #{tpu_custom_call.1} parent=71 // pred_check_branch
          %1749 = sbr.rel (%p1747) target = $region76
        $region75: #{tpu_custom_call.1} parent=71 // pred_region
          %s1750 = sand.u32 %s187, 1
          %s1751 = scalar_lea.sflag [#allocation4], %s1750
          %s1752 = sand.u32 %s187, 1
          %s1753 = smul.addr %s1752, 256
          %s1754 = scalar_lea.vmem [#allocation10], %s1753
          %1755 = dma.done %s1751, 4096
        $region76: #{tpu_custom_call.1} parent=71 // pred_fallthru
          _
      $region72: #{tpu_custom_call.1} parent=5 // pred_fallthru
        _
    $region6: #{tpu_custom_call.1} parent=1 // loop_footer
      %s25 = sadd.s32 1, %s21
    $region7: #{tpu_custom_call.1} parent=1 // loop_footer_branch
      %20 = sbr.rel target = $region3
    $region8: #{tpu_custom_call.1} parent=1 // loop_exit
      _
    %1756 = vsyncpa [#allocation3], 1
    %s1757 = scalar_lea.sflag [#allocation3], 1
    %1758 = vsyncpa %s1757, 1
    %1759 = vsyncpa [#allocation6], 1
    %1760 = vsyncpa [#allocation9], 1
    %1761 = vsyncpa [#allocation4], 1
    %s1762 = scalar_lea.sflag [#allocation4], 1
    %1763 = vsyncpa %s1762, 1

</llo_original>
